<compile_context>
chip_gen: v5e
topology: v5e:2x2
jax: 0.10.0
libtpu: 0.0.40
codegen_flags: <defaults>
</compile_context>

<pallas_src>
import jax
import jax.numpy as jnp
from jax.experimental import pallas as pl
from jax.experimental.pallas import tpu as pltpu  # noqa: F401  (kept for TPU-backend clarity)

# ---------------- model hyper-parameters (small, consistent with module) ----
EMB = 32            # embedding dimension
HEADS = 4           # attention heads
HEAD_DIM = EMB // HEADS
DEPTH = 2           # number of transformer blocks
SEQ_LEN = 8         # sequence length
NUM_TOKENS = 100    # vocabulary size
NUM_CLASSES = 4     # output classes
FF_MULT = 4         # ff_hidden_mult in TransformerBlock
FF = FF_MULT * EMB
BATCH = 2
ROWS = BATCH * SEQ_LEN
CPAD = 128          # lane-dense classifier slab width
LN_EPS = 1e-5       # PyTorch nn.LayerNorm default eps
NEG_BIG = -1e30     # "minus infinity" bias for the padded class lanes


# ---------------------------------------------------------------------------
# Single fused kernel: DEPTH transformer blocks + max-pool + classifier +
# log_softmax.  Embedding lookup already applied by the wrapper.
# ---------------------------------------------------------------------------
def fused_ctransformer_kernel(x0_ref, wqkv_ref, wu_ref, bu_ref,
                              g1_ref, be1_ref, w1_ref, bf1_ref,
                              w2_ref, bf2_ref, g2_ref, be2_ref,
                              wp_ref, bp_ref, out_ref):
    f32 = jnp.float32
    bf16 = jnp.bfloat16

    x = x0_ref[...]                                              # (ROWS, EMB) f32

    def layernorm(y, g, b):
        mu = jnp.mean(y, axis=-1, keepdims=True)
        dlt = y - mu
        var = jnp.mean(dlt * dlt, axis=-1, keepdims=True)
        return dlt * jax.lax.rsqrt(var + LN_EPS) * g + b

    for d in range(DEPTH):                                       # static unroll
        # ---- fused Q|K|V projection: ONE (ROWS,E)@(E,3E) MXU push ----------
        # (1/sqrt(EMB) score scale is pre-folded into the wq columns)
        qkv = jnp.dot(x.astype(bf16), wqkv_ref[d],
                      preferred_element_type=f32)                # (ROWS, 3E) f32

        # head-major lane slices -> (H, ROWS, S) -> (H*B, T, S)
        # (only leading-dim reshapes; the lane dim S stays last throughout)
        q = jnp.stack([qkv[:, h*HEAD_DIM:(h+1)*HEAD_DIM]
                       for h in range(HEADS)])
        k = jnp.stack([qkv[:, EMB + h*HEAD_DIM:EMB + (h+1)*HEAD_DIM]
                       for h in range(HEADS)])
        v = jnp.stack([qkv[:, 2*EMB + h*HEAD_DIM:2*EMB + (h+1)*HEAD_DIM]
                       for h in range(HEADS)])
        q = q.reshape(HEADS * BATCH, SEQ_LEN, HEAD_DIM)
        k = k.reshape(HEADS * BATCH, SEQ_LEN, HEAD_DIM)
        v = v.reshape(HEADS * BATCH, SEQ_LEN, HEAD_DIM)

        # ---- scores / softmax / PV (all f32 elementwise math) --------------
        sc = jnp.einsum('bqd,bkd->bqk', q, k,
                        preferred_element_type=f32)              # (H*B, T, T)
        sc = sc - jnp.max(sc, axis=-1, keepdims=True)
        p = jnp.exp(sc)
        p = p * pl.reciprocal(jnp.sum(p, axis=-1, keepdims=True), approx=True)
        o = jnp.einsum('bqk,bkd->bqd', p, v,
                       preferred_element_type=f32)               # (H*B, T, S)

        # ---- unify heads: relayout to (ROWS, H*S), ONE (E,E) f32 matmul ----
        o = o.reshape(HEADS, ROWS, HEAD_DIM)
        o_cat = jnp.concatenate([o[h] for h in range(HEADS)], axis=-1)  # (ROWS, E)
        att = jnp.dot(o_cat, wu_ref[d], preferred_element_type=f32) + bu_ref[d]

        # ---- residual + LayerNorm 1 -----------------------------------------
        x = layernorm(att + x, g1_ref[d], be1_ref[d])

        # ---- feed-forward: Linear(E, 4E) -> ReLU -> Linear(4E, E) -----------
        h1 = jnp.dot(x.astype(bf16), w1_ref[d],
                     preferred_element_type=f32) + bf1_ref[d]    # (ROWS, FF)
        h1 = jnp.maximum(h1, 0.0)
        ff = jnp.dot(h1, w2_ref[d], preferred_element_type=f32) + bf2_ref[d]

        # ---- residual + LayerNorm 2 -----------------------------------------
        x = layernorm(ff + x, g2_ref[d], be2_ref[d])

    # ---- classifier head: max-pool over seq, linear, log_softmax -----------
    pooled = jnp.max(x.reshape(BATCH, SEQ_LEN, EMB), axis=1)     # (B, E)
    logits = jnp.dot(pooled.astype(bf16), wp_ref[...],
                     preferred_element_type=f32) + bp_ref[...]   # (B, CPAD)
    # padded lanes carry bias ~ -1e30 so they cannot win the max or leak into exp.
    m = jnp.max(logits, axis=-1, keepdims=True)
    lse = m + jnp.log(jnp.sum(jnp.exp(logits - m), axis=-1, keepdims=True))
    out_ref[...] = logits - lse                                  # (B, CPAD)


# ---------------------------------------------------------------------------
# Parameter init (torch-like layout) and packing into kernel-friendly layout.
# Linear weights are stored pre-transposed as (in, out) so the kernel does x@W+b.
# ---------------------------------------------------------------------------
def init_params(key):
    def nrm(k, shape, scale=0.02):
        return (scale * jax.random.normal(k, shape)).astype(jnp.float32)

    keys = jax.random.split(key, 4 + DEPTH)
    params = {
        "tok_emb": nrm(keys[0], (NUM_TOKENS, EMB), 1.0),
        "pos_emb": nrm(keys[1], (SEQ_LEN, EMB), 1.0),
        "wp": nrm(keys[2], (EMB, NUM_CLASSES)),
        "bp": jnp.zeros((1, NUM_CLASSES), jnp.float32),
        "blocks": [],
    }
    for d in range(DEPTH):
        bk = jax.random.split(keys[4 + d], 6)
        params["blocks"].append({
            "wq": nrm(bk[0], (EMB, EMB)),
            "wk": nrm(bk[1], (EMB, EMB)),
            "wv": nrm(bk[2], (EMB, EMB)),
            "wu": nrm(bk[3], (EMB, EMB)),
            "bu": jnp.zeros((1, EMB), jnp.float32),
            "g1": jnp.ones((1, EMB), jnp.float32),
            "be1": jnp.zeros((1, EMB), jnp.float32),
            "w1": nrm(bk[4], (EMB, FF)),
            "bf1": jnp.zeros((1, FF), jnp.float32),
            "w2": nrm(bk[5], (FF, EMB)),
            "bf2": jnp.zeros((1, EMB), jnp.float32),
            "g2": jnp.ones((1, EMB), jnp.float32),
            "be2": jnp.zeros((1, EMB), jnp.float32),
        })
    return params


def pack_params(p):
    """Stack per-block weights over DEPTH; fuse Q|K|V; fold the score scale into wq."""
    blocks = p["blocks"]
    bf16 = jnp.bfloat16
    scale = 1.0 / (float(EMB) ** 0.5)   # == (emb**-0.25) applied to both q and k

    def stack(name):
        return jnp.stack([blk[name] for blk in blocks])          # (DEPTH, ...)

    # Fused QKV slab (EMB, 3*EMB); columns are already head-major (col = h*S + s),
    # matching torch's .view(b, t, h, s).  Scale folded into the wq columns.
    wqkv = jnp.stack([jnp.concatenate([blk["wq"] * scale, blk["wk"], blk["wv"]],
                                      axis=1) for blk in blocks])  # (DEPTH, E, 3E)

    wp_pad = jnp.zeros((EMB, CPAD), jnp.float32).at[:, :NUM_CLASSES].set(p["wp"])
    bp_pad = jnp.full((1, CPAD), NEG_BIG, jnp.float32).at[:, :NUM_CLASSES].set(p["bp"])

    return {
        "tok": p["tok_emb"],                 # consumed in the wrapper (exact f32)
        "pos": p["pos_emb"],
        "wqkv": wqkv.astype(bf16),           # MXU-native bf16, f32 accumulation
        "wu": stack("wu"),                   # f32: unify matmul needs no activation cast
        "bu": stack("bu"),
        "g1": stack("g1"), "be1": stack("be1"),
        "w1": stack("w1").astype(bf16), "bf1": stack("bf1"),
        "w2": stack("w2"), "bf2": stack("bf2"),   # w2 f32: avoids a second FF cast
        "g2": stack("g2"), "be2": stack("be2"),
        "wp": wp_pad.astype(bf16),
        "bp": bp_pad,
    }


# ---------------------------------------------------------------------------
# Wrapper: embedding gather + positional add in XLA, then one pallas_call.
# ---------------------------------------------------------------------------
@jax.jit
def ctransformer_forward(token_ids, packed):
    # Embedding lookup hoisted out of the kernel (trivially cheap gather in XLA);
    # positional embedding added via broadcast (no in-kernel concatenate).
    x0 = (packed["tok"][token_ids] + packed["pos"][None, :, :]).reshape(ROWS, EMB)
    # dropout p = 0.0 -> identity

    args = (x0, packed["wqkv"], packed["wu"], packed["bu"],
            packed["g1"], packed["be1"], packed["w1"], packed["bf1"],
            packed["w2"], packed["bf2"], packed["g2"], packed["be2"],
            packed["wp"], packed["bp"])

    out = pl.pallas_call(
        fused_ctransformer_kernel,
        out_shape=jax.ShapeDtypeStruct((BATCH, CPAD), jnp.float32),
        cost_estimate=pl.CostEstimate(flops=1_000_000,
                                      transcendentals=2_048,
                                      bytes_accessed=128 * 1024),
    )(*args)
    return out[:, :NUM_CLASSES]              # drop padded class lanes


if __name__ == "__main__":
    key = jax.random.PRNGKey(0)
    k_tok, k_par = jax.random.split(key)
    token_ids = jax.random.randint(k_tok, (BATCH, SEQ_LEN), 0, NUM_TOKENS,
                                   dtype=jnp.int32)
    params = init_params(k_par)
    packed = pack_params(params)             # one-time layout packing, outside hot path

    logprobs = ctransformer_forward(token_ids, packed)
    jax.block_until_ready(logprobs)

    assert logprobs.shape == (BATCH, NUM_CLASSES)
    assert bool(jnp.all(jnp.isfinite(logprobs)))
    # log_softmax rows must exponentiate to ~1 (final normalization is exact f32).
    prob_sums = jnp.exp(logprobs).sum(axis=-1)
    assert bool(jnp.all(jnp.abs(prob_sums - 1.0) < 1e-2))
    print("KERNEL_OK")
</pallas_src>

<mosaic_0001>
module attributes {stable_mosaic.version = 11 : i64} {
  func.func @fused_ctransformer_kernel(%arg0: memref<16x32xf32, #tpu.memory_space<vmem>>, %arg1: memref<2x32x96xbf16, #tpu.memory_space<vmem>>, %arg2: memref<2x32x32xf32, #tpu.memory_space<vmem>>, %arg3: memref<2x1x32xf32, #tpu.memory_space<vmem>>, %arg4: memref<2x1x32xf32, #tpu.memory_space<vmem>>, %arg5: memref<2x1x32xf32, #tpu.memory_space<vmem>>, %arg6: memref<2x32x128xbf16, #tpu.memory_space<vmem>>, %arg7: memref<2x1x128xf32, #tpu.memory_space<vmem>>, %arg8: memref<2x128x32xf32, #tpu.memory_space<vmem>>, %arg9: memref<2x1x32xf32, #tpu.memory_space<vmem>>, %arg10: memref<2x1x32xf32, #tpu.memory_space<vmem>>, %arg11: memref<2x1x32xf32, #tpu.memory_space<vmem>>, %arg12: memref<32x128xbf16, #tpu.memory_space<vmem>>, %arg13: memref<1x128xf32, #tpu.memory_space<vmem>>, %arg14: memref<2x128xf32, #tpu.memory_space<vmem>>) attributes {dimension_semantics = [], scalar_prefetch = 0 : i64, scratch_operands = 0 : i64, tpu.core_type = #tpu.core_type<tc>} {
    %c0 = arith.constant 0 : index
    %c0_0 = arith.constant 0 : index
    %0 = vector.load %arg0[%c0, %c0_0] : memref<16x32xf32, #tpu.memory_space<vmem>>, vector<16x32xf32>
    %1 = arith.truncf %0 : vector<16x32xf32> to vector<16x32xbf16>
    %c0_1 = arith.constant 0 : index
    %c0_2 = arith.constant 0 : index
    %c0_3 = arith.constant 0 : index
    %2 = vector.load %arg1[%c0_1, %c0_2, %c0_3] : memref<2x32x96xbf16, #tpu.memory_space<vmem>>, vector<1x32x96xbf16>
    %3 = vector.shape_cast %2 : vector<1x32x96xbf16> to vector<32x96xbf16>
    %cst = arith.constant dense<0.000000e+00> : vector<16x96xf32>
    %4 = tpu.matmul %1, %3, %cst {dimension_numbers = #tpu.dot_dimension_numbers<[1], [0], [0], [1], [0, 0, 1, 1], [], []>} : vector<16x32xbf16>, vector<32x96xbf16>, vector<16x96xf32> -> vector<16x96xf32>
    %5 = vector.extract_strided_slice %4 {offsets = [0, 0], sizes = [16, 8], strides = [1, 1]} : vector<16x96xf32> to vector<16x8xf32>
    %6 = vector.extract_strided_slice %4 {offsets = [0, 8], sizes = [16, 8], strides = [1, 1]} : vector<16x96xf32> to vector<16x8xf32>
    %7 = vector.extract_strided_slice %4 {offsets = [0, 16], sizes = [16, 8], strides = [1, 1]} : vector<16x96xf32> to vector<16x8xf32>
    %8 = vector.extract_strided_slice %4 {offsets = [0, 24], sizes = [16, 8], strides = [1, 1]} : vector<16x96xf32> to vector<16x8xf32>
    %9 = vector.shape_cast %5 : vector<16x8xf32> to vector<1x16x8xf32>
    %10 = vector.shape_cast %6 : vector<16x8xf32> to vector<1x16x8xf32>
    %11 = vector.shape_cast %7 : vector<16x8xf32> to vector<1x16x8xf32>
    %12 = vector.shape_cast %8 : vector<16x8xf32> to vector<1x16x8xf32>
    %13 = tpu.concatenate %9, %10, %11, %12 in 0 : vector<1x16x8xf32>, vector<1x16x8xf32>, vector<1x16x8xf32>, vector<1x16x8xf32> -> vector<4x16x8xf32>
    %14 = vector.extract_strided_slice %4 {offsets = [0, 32], sizes = [16, 8], strides = [1, 1]} : vector<16x96xf32> to vector<16x8xf32>
    %15 = vector.extract_strided_slice %4 {offsets = [0, 40], sizes = [16, 8], strides = [1, 1]} : vector<16x96xf32> to vector<16x8xf32>
    %16 = vector.extract_strided_slice %4 {offsets = [0, 48], sizes = [16, 8], strides = [1, 1]} : vector<16x96xf32> to vector<16x8xf32>
    %17 = vector.extract_strided_slice %4 {offsets = [0, 56], sizes = [16, 8], strides = [1, 1]} : vector<16x96xf32> to vector<16x8xf32>
    %18 = vector.shape_cast %14 : vector<16x8xf32> to vector<1x16x8xf32>
    %19 = vector.shape_cast %15 : vector<16x8xf32> to vector<1x16x8xf32>
    %20 = vector.shape_cast %16 : vector<16x8xf32> to vector<1x16x8xf32>
    %21 = vector.shape_cast %17 : vector<16x8xf32> to vector<1x16x8xf32>
    %22 = tpu.concatenate %18, %19, %20, %21 in 0 : vector<1x16x8xf32>, vector<1x16x8xf32>, vector<1x16x8xf32>, vector<1x16x8xf32> -> vector<4x16x8xf32>
    %23 = vector.extract_strided_slice %4 {offsets = [0, 64], sizes = [16, 8], strides = [1, 1]} : vector<16x96xf32> to vector<16x8xf32>
    %24 = vector.extract_strided_slice %4 {offsets = [0, 72], sizes = [16, 8], strides = [1, 1]} : vector<16x96xf32> to vector<16x8xf32>
    %25 = vector.extract_strided_slice %4 {offsets = [0, 80], sizes = [16, 8], strides = [1, 1]} : vector<16x96xf32> to vector<16x8xf32>
    %26 = vector.extract_strided_slice %4 {offsets = [0, 88], sizes = [16, 8], strides = [1, 1]} : vector<16x96xf32> to vector<16x8xf32>
    %27 = vector.shape_cast %23 : vector<16x8xf32> to vector<1x16x8xf32>
    %28 = vector.shape_cast %24 : vector<16x8xf32> to vector<1x16x8xf32>
    %29 = vector.shape_cast %25 : vector<16x8xf32> to vector<1x16x8xf32>
    %30 = vector.shape_cast %26 : vector<16x8xf32> to vector<1x16x8xf32>
    %31 = tpu.concatenate %27, %28, %29, %30 in 0 : vector<1x16x8xf32>, vector<1x16x8xf32>, vector<1x16x8xf32>, vector<1x16x8xf32> -> vector<4x16x8xf32>
    %32 = vector.shape_cast %13 : vector<4x16x8xf32> to vector<8x8x8xf32>
    %33 = vector.shape_cast %22 : vector<4x16x8xf32> to vector<8x8x8xf32>
    %34 = vector.shape_cast %31 : vector<4x16x8xf32> to vector<8x8x8xf32>
    "tpu.trace_start"() <{level = 10 : i32, message = "bqd,bkd->bqk"}> : () -> ()
    %cst_4 = arith.constant dense<0.000000e+00> : vector<8x8x8xf32>
    %35 = tpu.matmul %32, %33, %cst_4 {dimension_numbers = #tpu.dot_dimension_numbers<[2], [2], [1], [1], [0, 0, 0, 1, 1, 1], [0], [0]>} : vector<8x8x8xf32>, vector<8x8x8xf32>, vector<8x8x8xf32> -> vector<8x8x8xf32>
    "tpu.trace_stop"() : () -> ()
    %cst_5 = arith.constant dense<0xFF800000> : vector<8x8xf32>
    %36 = vector.multi_reduction <maximumf>, %35, %cst_5 [2] : vector<8x8x8xf32> to vector<8x8xf32>
    %37 = vector.shape_cast %36 : vector<8x8xf32> to vector<8x8x1xf32>
    %38 = vector.broadcast %37 : vector<8x8x1xf32> to vector<8x8x8xf32>
    %39 = arith.subf %35, %38 : vector<8x8x8xf32>
    %40 = math.exp %39 : vector<8x8x8xf32>
    %cst_6 = arith.constant dense<0.000000e+00> : vector<8x8xf32>
    %41 = vector.multi_reduction <add>, %40, %cst_6 [2] : vector<8x8x8xf32> to vector<8x8xf32>
    %42 = vector.shape_cast %41 : vector<8x8xf32> to vector<8x8x1xf32>
    %43 = tpu.reciprocal %42 {approx = true} : vector<8x8x1xf32> -> vector<8x8x1xf32>
    %44 = vector.broadcast %43 : vector<8x8x1xf32> to vector<8x8x8xf32>
    %45 = arith.mulf %40, %44 : vector<8x8x8xf32>
    "tpu.trace_start"() <{level = 10 : i32, message = "bqk,bkd->bqd"}> : () -> ()
    %cst_7 = arith.constant dense<0.000000e+00> : vector<8x8x8xf32>
    %46 = tpu.matmul %45, %34, %cst_7 {dimension_numbers = #tpu.dot_dimension_numbers<[2], [1], [1], [2], [0, 0, 0, 1, 1, 2], [0], [0]>} : vector<8x8x8xf32>, vector<8x8x8xf32>, vector<8x8x8xf32> -> vector<8x8x8xf32>
    "tpu.trace_stop"() : () -> ()
    %47 = vector.shape_cast %46 : vector<8x8x8xf32> to vector<4x16x8xf32>
    %48 = vector.extract_strided_slice %47 {offsets = [0, 0, 0], sizes = [1, 16, 8], strides = [1, 1, 1]} : vector<4x16x8xf32> to vector<1x16x8xf32>
    %49 = vector.shape_cast %48 : vector<1x16x8xf32> to vector<16x8xf32>
    %50 = vector.extract_strided_slice %47 {offsets = [1, 0, 0], sizes = [1, 16, 8], strides = [1, 1, 1]} : vector<4x16x8xf32> to vector<1x16x8xf32>
    %51 = vector.shape_cast %50 : vector<1x16x8xf32> to vector<16x8xf32>
    %52 = vector.extract_strided_slice %47 {offsets = [2, 0, 0], sizes = [1, 16, 8], strides = [1, 1, 1]} : vector<4x16x8xf32> to vector<1x16x8xf32>
    %53 = vector.shape_cast %52 : vector<1x16x8xf32> to vector<16x8xf32>
    %54 = vector.extract_strided_slice %47 {offsets = [3, 0, 0], sizes = [1, 16, 8], strides = [1, 1, 1]} : vector<4x16x8xf32> to vector<1x16x8xf32>
    %55 = vector.shape_cast %54 : vector<1x16x8xf32> to vector<16x8xf32>
    %56 = tpu.concatenate %49, %51, %53, %55 in 1 : vector<16x8xf32>, vector<16x8xf32>, vector<16x8xf32>, vector<16x8xf32> -> vector<16x32xf32>
    %c0_8 = arith.constant 0 : index
    %c0_9 = arith.constant 0 : index
    %c0_10 = arith.constant 0 : index
    %57 = vector.load %arg2[%c0_8, %c0_9, %c0_10] : memref<2x32x32xf32, #tpu.memory_space<vmem>>, vector<1x32x32xf32>
    %58 = vector.shape_cast %57 : vector<1x32x32xf32> to vector<32x32xf32>
    %cst_11 = arith.constant dense<0.000000e+00> : vector<16x32xf32>
    %59 = tpu.matmul %56, %58, %cst_11 {dimension_numbers = #tpu.dot_dimension_numbers<[1], [0], [0], [1], [0, 0, 1, 1], [], []>} : vector<16x32xf32>, vector<32x32xf32>, vector<16x32xf32> -> vector<16x32xf32>
    %c0_12 = arith.constant 0 : index
    %c0_13 = arith.constant 0 : index
    %c0_14 = arith.constant 0 : index
    %60 = vector.load %arg3[%c0_12, %c0_13, %c0_14] : memref<2x1x32xf32, #tpu.memory_space<vmem>>, vector<1x1x32xf32>
    %61 = vector.shape_cast %60 : vector<1x1x32xf32> to vector<1x32xf32>
    %62 = vector.broadcast %61 : vector<1x32xf32> to vector<16x32xf32>
    %63 = arith.addf %59, %62 : vector<16x32xf32>
    %64 = arith.addf %63, %0 : vector<16x32xf32>
    %c0_15 = arith.constant 0 : index
    %c0_16 = arith.constant 0 : index
    %c0_17 = arith.constant 0 : index
    %65 = vector.load %arg4[%c0_15, %c0_16, %c0_17] : memref<2x1x32xf32, #tpu.memory_space<vmem>>, vector<1x1x32xf32>
    %66 = vector.shape_cast %65 : vector<1x1x32xf32> to vector<1x32xf32>
    %c0_18 = arith.constant 0 : index
    %c0_19 = arith.constant 0 : index
    %c0_20 = arith.constant 0 : index
    %67 = vector.load %arg5[%c0_18, %c0_19, %c0_20] : memref<2x1x32xf32, #tpu.memory_space<vmem>>, vector<1x1x32xf32>
    %68 = vector.shape_cast %67 : vector<1x1x32xf32> to vector<1x32xf32>
    %cst_21 = arith.constant dense<0.000000e+00> : vector<16xf32>
    %69 = vector.multi_reduction <add>, %64, %cst_21 [1] : vector<16x32xf32> to vector<16xf32>
    %70 = vector.shape_cast %69 : vector<16xf32> to vector<16x1xf32>
    %cst_22 = arith.constant 3.200000e+01 : f32
    %71 = vector.broadcast %cst_22 : f32 to vector<16x1xf32>
    %72 = arith.divf %70, %71 : vector<16x1xf32>
    %73 = vector.broadcast %72 : vector<16x1xf32> to vector<16x32xf32>
    %74 = arith.subf %64, %73 : vector<16x32xf32>
    %75 = arith.mulf %74, %74 : vector<16x32xf32>
    %cst_23 = arith.constant dense<0.000000e+00> : vector<16xf32>
    %76 = vector.multi_reduction <add>, %75, %cst_23 [1] : vector<16x32xf32> to vector<16xf32>
    %77 = vector.shape_cast %76 : vector<16xf32> to vector<16x1xf32>
    %cst_24 = arith.constant 3.200000e+01 : f32
    %78 = vector.broadcast %cst_24 : f32 to vector<16x1xf32>
    %79 = arith.divf %77, %78 : vector<16x1xf32>
    %cst_25 = arith.constant 9.99999974E-6 : f32
    %80 = vector.broadcast %cst_25 : f32 to vector<16x1xf32>
    %81 = arith.addf %79, %80 : vector<16x1xf32>
    %82 = math.rsqrt %81 : vector<16x1xf32>
    %83 = vector.broadcast %82 : vector<16x1xf32> to vector<16x32xf32>
    %84 = arith.mulf %74, %83 : vector<16x32xf32>
    %85 = vector.broadcast %66 : vector<1x32xf32> to vector<16x32xf32>
    %86 = arith.mulf %84, %85 : vector<16x32xf32>
    %87 = vector.broadcast %68 : vector<1x32xf32> to vector<16x32xf32>
    %88 = arith.addf %86, %87 : vector<16x32xf32>
    %89 = arith.truncf %88 : vector<16x32xf32> to vector<16x32xbf16>
    %c0_26 = arith.constant 0 : index
    %c0_27 = arith.constant 0 : index
    %c0_28 = arith.constant 0 : index
    %90 = vector.load %arg6[%c0_26, %c0_27, %c0_28] : memref<2x32x128xbf16, #tpu.memory_space<vmem>>, vector<1x32x128xbf16>
    %91 = vector.shape_cast %90 : vector<1x32x128xbf16> to vector<32x128xbf16>
    %cst_29 = arith.constant dense<0.000000e+00> : vector<16x128xf32>
    %92 = tpu.matmul %89, %91, %cst_29 {dimension_numbers = #tpu.dot_dimension_numbers<[1], [0], [0], [1], [0, 0, 1, 1], [], []>} : vector<16x32xbf16>, vector<32x128xbf16>, vector<16x128xf32> -> vector<16x128xf32>
    %c0_30 = arith.constant 0 : index
    %c0_31 = arith.constant 0 : index
    %c0_32 = arith.constant 0 : index
    %93 = vector.load %arg7[%c0_30, %c0_31, %c0_32] : memref<2x1x128xf32, #tpu.memory_space<vmem>>, vector<1x1x128xf32>
    %94 = vector.shape_cast %93 : vector<1x1x128xf32> to vector<1x128xf32>
    %95 = vector.broadcast %94 : vector<1x128xf32> to vector<16x128xf32>
    %96 = arith.addf %92, %95 : vector<16x128xf32>
    %cst_33 = arith.constant 0.000000e+00 : f32
    %97 = vector.broadcast %cst_33 : f32 to vector<16x128xf32>
    %98 = arith.maximumf %96, %97 : vector<16x128xf32>
    %c0_34 = arith.constant 0 : index
    %c0_35 = arith.constant 0 : index
    %c0_36 = arith.constant 0 : index
    %99 = vector.load %arg8[%c0_34, %c0_35, %c0_36] : memref<2x128x32xf32, #tpu.memory_space<vmem>>, vector<1x128x32xf32>
    %100 = vector.shape_cast %99 : vector<1x128x32xf32> to vector<128x32xf32>
    %cst_37 = arith.constant dense<0.000000e+00> : vector<16x32xf32>
    %101 = tpu.matmul %98, %100, %cst_37 {dimension_numbers = #tpu.dot_dimension_numbers<[1], [0], [0], [1], [0, 0, 1, 1], [], []>} : vector<16x128xf32>, vector<128x32xf32>, vector<16x32xf32> -> vector<16x32xf32>
    %c0_38 = arith.constant 0 : index
    %c0_39 = arith.constant 0 : index
    %c0_40 = arith.constant 0 : index
    %102 = vector.load %arg9[%c0_38, %c0_39, %c0_40] : memref<2x1x32xf32, #tpu.memory_space<vmem>>, vector<1x1x32xf32>
    %103 = vector.shape_cast %102 : vector<1x1x32xf32> to vector<1x32xf32>
    %104 = vector.broadcast %103 : vector<1x32xf32> to vector<16x32xf32>
    %105 = arith.addf %101, %104 : vector<16x32xf32>
    %106 = arith.addf %105, %88 : vector<16x32xf32>
    %c0_41 = arith.constant 0 : index
    %c0_42 = arith.constant 0 : index
    %c0_43 = arith.constant 0 : index
    %107 = vector.load %arg10[%c0_41, %c0_42, %c0_43] : memref<2x1x32xf32, #tpu.memory_space<vmem>>, vector<1x1x32xf32>
    %108 = vector.shape_cast %107 : vector<1x1x32xf32> to vector<1x32xf32>
    %c0_44 = arith.constant 0 : index
    %c0_45 = arith.constant 0 : index
    %c0_46 = arith.constant 0 : index
    %109 = vector.load %arg11[%c0_44, %c0_45, %c0_46] : memref<2x1x32xf32, #tpu.memory_space<vmem>>, vector<1x1x32xf32>
    %110 = vector.shape_cast %109 : vector<1x1x32xf32> to vector<1x32xf32>
    %cst_47 = arith.constant dense<0.000000e+00> : vector<16xf32>
    %111 = vector.multi_reduction <add>, %106, %cst_47 [1] : vector<16x32xf32> to vector<16xf32>
    %112 = vector.shape_cast %111 : vector<16xf32> to vector<16x1xf32>
    %cst_48 = arith.constant 3.200000e+01 : f32
    %113 = vector.broadcast %cst_48 : f32 to vector<16x1xf32>
    %114 = arith.divf %112, %113 : vector<16x1xf32>
    %115 = vector.broadcast %114 : vector<16x1xf32> to vector<16x32xf32>
    %116 = arith.subf %106, %115 : vector<16x32xf32>
    %117 = arith.mulf %116, %116 : vector<16x32xf32>
    %cst_49 = arith.constant dense<0.000000e+00> : vector<16xf32>
    %118 = vector.multi_reduction <add>, %117, %cst_49 [1] : vector<16x32xf32> to vector<16xf32>
    %119 = vector.shape_cast %118 : vector<16xf32> to vector<16x1xf32>
    %cst_50 = arith.constant 3.200000e+01 : f32
    %120 = vector.broadcast %cst_50 : f32 to vector<16x1xf32>
    %121 = arith.divf %119, %120 : vector<16x1xf32>
    %cst_51 = arith.constant 9.99999974E-6 : f32
    %122 = vector.broadcast %cst_51 : f32 to vector<16x1xf32>
    %123 = arith.addf %121, %122 : vector<16x1xf32>
    %124 = math.rsqrt %123 : vector<16x1xf32>
    %125 = vector.broadcast %124 : vector<16x1xf32> to vector<16x32xf32>
    %126 = arith.mulf %116, %125 : vector<16x32xf32>
    %127 = vector.broadcast %108 : vector<1x32xf32> to vector<16x32xf32>
    %128 = arith.mulf %126, %127 : vector<16x32xf32>
    %129 = vector.broadcast %110 : vector<1x32xf32> to vector<16x32xf32>
    %130 = arith.addf %128, %129 : vector<16x32xf32>
    %131 = arith.truncf %130 : vector<16x32xf32> to vector<16x32xbf16>
    %c1 = arith.constant 1 : index
    %c0_52 = arith.constant 0 : index
    %c0_53 = arith.constant 0 : index
    %132 = vector.load %arg1[%c1, %c0_52, %c0_53] : memref<2x32x96xbf16, #tpu.memory_space<vmem>>, vector<1x32x96xbf16>
    %133 = vector.shape_cast %132 : vector<1x32x96xbf16> to vector<32x96xbf16>
    %cst_54 = arith.constant dense<0.000000e+00> : vector<16x96xf32>
    %134 = tpu.matmul %131, %133, %cst_54 {dimension_numbers = #tpu.dot_dimension_numbers<[1], [0], [0], [1], [0, 0, 1, 1], [], []>} : vector<16x32xbf16>, vector<32x96xbf16>, vector<16x96xf32> -> vector<16x96xf32>
    %135 = vector.extract_strided_slice %134 {offsets = [0, 0], sizes = [16, 8], strides = [1, 1]} : vector<16x96xf32> to vector<16x8xf32>
    %136 = vector.extract_strided_slice %134 {offsets = [0, 8], sizes = [16, 8], strides = [1, 1]} : vector<16x96xf32> to vector<16x8xf32>
    %137 = vector.extract_strided_slice %134 {offsets = [0, 16], sizes = [16, 8], strides = [1, 1]} : vector<16x96xf32> to vector<16x8xf32>
    %138 = vector.extract_strided_slice %134 {offsets = [0, 24], sizes = [16, 8], strides = [1, 1]} : vector<16x96xf32> to vector<16x8xf32>
    %139 = vector.shape_cast %135 : vector<16x8xf32> to vector<1x16x8xf32>
    %140 = vector.shape_cast %136 : vector<16x8xf32> to vector<1x16x8xf32>
    %141 = vector.shape_cast %137 : vector<16x8xf32> to vector<1x16x8xf32>
    %142 = vector.shape_cast %138 : vector<16x8xf32> to vector<1x16x8xf32>
    %143 = tpu.concatenate %139, %140, %141, %142 in 0 : vector<1x16x8xf32>, vector<1x16x8xf32>, vector<1x16x8xf32>, vector<1x16x8xf32> -> vector<4x16x8xf32>
    %144 = vector.extract_strided_slice %134 {offsets = [0, 32], sizes = [16, 8], strides = [1, 1]} : vector<16x96xf32> to vector<16x8xf32>
    %145 = vector.extract_strided_slice %134 {offsets = [0, 40], sizes = [16, 8], strides = [1, 1]} : vector<16x96xf32> to vector<16x8xf32>
    %146 = vector.extract_strided_slice %134 {offsets = [0, 48], sizes = [16, 8], strides = [1, 1]} : vector<16x96xf32> to vector<16x8xf32>
    %147 = vector.extract_strided_slice %134 {offsets = [0, 56], sizes = [16, 8], strides = [1, 1]} : vector<16x96xf32> to vector<16x8xf32>
    %148 = vector.shape_cast %144 : vector<16x8xf32> to vector<1x16x8xf32>
    %149 = vector.shape_cast %145 : vector<16x8xf32> to vector<1x16x8xf32>
    %150 = vector.shape_cast %146 : vector<16x8xf32> to vector<1x16x8xf32>
    %151 = vector.shape_cast %147 : vector<16x8xf32> to vector<1x16x8xf32>
    %152 = tpu.concatenate %148, %149, %150, %151 in 0 : vector<1x16x8xf32>, vector<1x16x8xf32>, vector<1x16x8xf32>, vector<1x16x8xf32> -> vector<4x16x8xf32>
    %153 = vector.extract_strided_slice %134 {offsets = [0, 64], sizes = [16, 8], strides = [1, 1]} : vector<16x96xf32> to vector<16x8xf32>
    %154 = vector.extract_strided_slice %134 {offsets = [0, 72], sizes = [16, 8], strides = [1, 1]} : vector<16x96xf32> to vector<16x8xf32>
    %155 = vector.extract_strided_slice %134 {offsets = [0, 80], sizes = [16, 8], strides = [1, 1]} : vector<16x96xf32> to vector<16x8xf32>
    %156 = vector.extract_strided_slice %134 {offsets = [0, 88], sizes = [16, 8], strides = [1, 1]} : vector<16x96xf32> to vector<16x8xf32>
    %157 = vector.shape_cast %153 : vector<16x8xf32> to vector<1x16x8xf32>
    %158 = vector.shape_cast %154 : vector<16x8xf32> to vector<1x16x8xf32>
    %159 = vector.shape_cast %155 : vector<16x8xf32> to vector<1x16x8xf32>
    %160 = vector.shape_cast %156 : vector<16x8xf32> to vector<1x16x8xf32>
    %161 = tpu.concatenate %157, %158, %159, %160 in 0 : vector<1x16x8xf32>, vector<1x16x8xf32>, vector<1x16x8xf32>, vector<1x16x8xf32> -> vector<4x16x8xf32>
    %162 = vector.shape_cast %143 : vector<4x16x8xf32> to vector<8x8x8xf32>
    %163 = vector.shape_cast %152 : vector<4x16x8xf32> to vector<8x8x8xf32>
    %164 = vector.shape_cast %161 : vector<4x16x8xf32> to vector<8x8x8xf32>
    "tpu.trace_start"() <{level = 10 : i32, message = "bqd,bkd->bqk"}> : () -> ()
    %cst_55 = arith.constant dense<0.000000e+00> : vector<8x8x8xf32>
    %165 = tpu.matmul %162, %163, %cst_55 {dimension_numbers = #tpu.dot_dimension_numbers<[2], [2], [1], [1], [0, 0, 0, 1, 1, 1], [0], [0]>} : vector<8x8x8xf32>, vector<8x8x8xf32>, vector<8x8x8xf32> -> vector<8x8x8xf32>
    "tpu.trace_stop"() : () -> ()
    %cst_56 = arith.constant dense<0xFF800000> : vector<8x8xf32>
    %166 = vector.multi_reduction <maximumf>, %165, %cst_56 [2] : vector<8x8x8xf32> to vector<8x8xf32>
    %167 = vector.shape_cast %166 : vector<8x8xf32> to vector<8x8x1xf32>
    %168 = vector.broadcast %167 : vector<8x8x1xf32> to vector<8x8x8xf32>
    %169 = arith.subf %165, %168 : vector<8x8x8xf32>
    %170 = math.exp %169 : vector<8x8x8xf32>
    %cst_57 = arith.constant dense<0.000000e+00> : vector<8x8xf32>
    %171 = vector.multi_reduction <add>, %170, %cst_57 [2] : vector<8x8x8xf32> to vector<8x8xf32>
    %172 = vector.shape_cast %171 : vector<8x8xf32> to vector<8x8x1xf32>
    %173 = tpu.reciprocal %172 {approx = true} : vector<8x8x1xf32> -> vector<8x8x1xf32>
    %174 = vector.broadcast %173 : vector<8x8x1xf32> to vector<8x8x8xf32>
    %175 = arith.mulf %170, %174 : vector<8x8x8xf32>
    "tpu.trace_start"() <{level = 10 : i32, message = "bqk,bkd->bqd"}> : () -> ()
    %cst_58 = arith.constant dense<0.000000e+00> : vector<8x8x8xf32>
    %176 = tpu.matmul %175, %164, %cst_58 {dimension_numbers = #tpu.dot_dimension_numbers<[2], [1], [1], [2], [0, 0, 0, 1, 1, 2], [0], [0]>} : vector<8x8x8xf32>, vector<8x8x8xf32>, vector<8x8x8xf32> -> vector<8x8x8xf32>
    "tpu.trace_stop"() : () -> ()
    %177 = vector.shape_cast %176 : vector<8x8x8xf32> to vector<4x16x8xf32>
    %178 = vector.extract_strided_slice %177 {offsets = [0, 0, 0], sizes = [1, 16, 8], strides = [1, 1, 1]} : vector<4x16x8xf32> to vector<1x16x8xf32>
    %179 = vector.shape_cast %178 : vector<1x16x8xf32> to vector<16x8xf32>
    %180 = vector.extract_strided_slice %177 {offsets = [1, 0, 0], sizes = [1, 16, 8], strides = [1, 1, 1]} : vector<4x16x8xf32> to vector<1x16x8xf32>
    %181 = vector.shape_cast %180 : vector<1x16x8xf32> to vector<16x8xf32>
    %182 = vector.extract_strided_slice %177 {offsets = [2, 0, 0], sizes = [1, 16, 8], strides = [1, 1, 1]} : vector<4x16x8xf32> to vector<1x16x8xf32>
    %183 = vector.shape_cast %182 : vector<1x16x8xf32> to vector<16x8xf32>
    %184 = vector.extract_strided_slice %177 {offsets = [3, 0, 0], sizes = [1, 16, 8], strides = [1, 1, 1]} : vector<4x16x8xf32> to vector<1x16x8xf32>
    %185 = vector.shape_cast %184 : vector<1x16x8xf32> to vector<16x8xf32>
    %186 = tpu.concatenate %179, %181, %183, %185 in 1 : vector<16x8xf32>, vector<16x8xf32>, vector<16x8xf32>, vector<16x8xf32> -> vector<16x32xf32>
    %c1_59 = arith.constant 1 : index
    %c0_60 = arith.constant 0 : index
    %c0_61 = arith.constant 0 : index
    %187 = vector.load %arg2[%c1_59, %c0_60, %c0_61] : memref<2x32x32xf32, #tpu.memory_space<vmem>>, vector<1x32x32xf32>
    %188 = vector.shape_cast %187 : vector<1x32x32xf32> to vector<32x32xf32>
    %cst_62 = arith.constant dense<0.000000e+00> : vector<16x32xf32>
    %189 = tpu.matmul %186, %188, %cst_62 {dimension_numbers = #tpu.dot_dimension_numbers<[1], [0], [0], [1], [0, 0, 1, 1], [], []>} : vector<16x32xf32>, vector<32x32xf32>, vector<16x32xf32> -> vector<16x32xf32>
    %c1_63 = arith.constant 1 : index
    %c0_64 = arith.constant 0 : index
    %c0_65 = arith.constant 0 : index
    %190 = vector.load %arg3[%c1_63, %c0_64, %c0_65] : memref<2x1x32xf32, #tpu.memory_space<vmem>>, vector<1x1x32xf32>
    %191 = vector.shape_cast %190 : vector<1x1x32xf32> to vector<1x32xf32>
    %192 = vector.broadcast %191 : vector<1x32xf32> to vector<16x32xf32>
    %193 = arith.addf %189, %192 : vector<16x32xf32>
    %194 = arith.addf %193, %130 : vector<16x32xf32>
    %c1_66 = arith.constant 1 : index
    %c0_67 = arith.constant 0 : index
    %c0_68 = arith.constant 0 : index
    %195 = vector.load %arg4[%c1_66, %c0_67, %c0_68] : memref<2x1x32xf32, #tpu.memory_space<vmem>>, vector<1x1x32xf32>
    %196 = vector.shape_cast %195 : vector<1x1x32xf32> to vector<1x32xf32>
    %c1_69 = arith.constant 1 : index
    %c0_70 = arith.constant 0 : index
    %c0_71 = arith.constant 0 : index
    %197 = vector.load %arg5[%c1_69, %c0_70, %c0_71] : memref<2x1x32xf32, #tpu.memory_space<vmem>>, vector<1x1x32xf32>
    %198 = vector.shape_cast %197 : vector<1x1x32xf32> to vector<1x32xf32>
    %cst_72 = arith.constant dense<0.000000e+00> : vector<16xf32>
    %199 = vector.multi_reduction <add>, %194, %cst_72 [1] : vector<16x32xf32> to vector<16xf32>
    %200 = vector.shape_cast %199 : vector<16xf32> to vector<16x1xf32>
    %cst_73 = arith.constant 3.200000e+01 : f32
    %201 = vector.broadcast %cst_73 : f32 to vector<16x1xf32>
    %202 = arith.divf %200, %201 : vector<16x1xf32>
    %203 = vector.broadcast %202 : vector<16x1xf32> to vector<16x32xf32>
    %204 = arith.subf %194, %203 : vector<16x32xf32>
    %205 = arith.mulf %204, %204 : vector<16x32xf32>
    %cst_74 = arith.constant dense<0.000000e+00> : vector<16xf32>
    %206 = vector.multi_reduction <add>, %205, %cst_74 [1] : vector<16x32xf32> to vector<16xf32>
    %207 = vector.shape_cast %206 : vector<16xf32> to vector<16x1xf32>
    %cst_75 = arith.constant 3.200000e+01 : f32
    %208 = vector.broadcast %cst_75 : f32 to vector<16x1xf32>
    %209 = arith.divf %207, %208 : vector<16x1xf32>
    %cst_76 = arith.constant 9.99999974E-6 : f32
    %210 = vector.broadcast %cst_76 : f32 to vector<16x1xf32>
    %211 = arith.addf %209, %210 : vector<16x1xf32>
    %212 = math.rsqrt %211 : vector<16x1xf32>
    %213 = vector.broadcast %212 : vector<16x1xf32> to vector<16x32xf32>
    %214 = arith.mulf %204, %213 : vector<16x32xf32>
    %215 = vector.broadcast %196 : vector<1x32xf32> to vector<16x32xf32>
    %216 = arith.mulf %214, %215 : vector<16x32xf32>
    %217 = vector.broadcast %198 : vector<1x32xf32> to vector<16x32xf32>
    %218 = arith.addf %216, %217 : vector<16x32xf32>
    %219 = arith.truncf %218 : vector<16x32xf32> to vector<16x32xbf16>
    %c1_77 = arith.constant 1 : index
    %c0_78 = arith.constant 0 : index
    %c0_79 = arith.constant 0 : index
    %220 = vector.load %arg6[%c1_77, %c0_78, %c0_79] : memref<2x32x128xbf16, #tpu.memory_space<vmem>>, vector<1x32x128xbf16>
    %221 = vector.shape_cast %220 : vector<1x32x128xbf16> to vector<32x128xbf16>
    %cst_80 = arith.constant dense<0.000000e+00> : vector<16x128xf32>
    %222 = tpu.matmul %219, %221, %cst_80 {dimension_numbers = #tpu.dot_dimension_numbers<[1], [0], [0], [1], [0, 0, 1, 1], [], []>} : vector<16x32xbf16>, vector<32x128xbf16>, vector<16x128xf32> -> vector<16x128xf32>
    %c1_81 = arith.constant 1 : index
    %c0_82 = arith.constant 0 : index
    %c0_83 = arith.constant 0 : index
    %223 = vector.load %arg7[%c1_81, %c0_82, %c0_83] : memref<2x1x128xf32, #tpu.memory_space<vmem>>, vector<1x1x128xf32>
    %224 = vector.shape_cast %223 : vector<1x1x128xf32> to vector<1x128xf32>
    %225 = vector.broadcast %224 : vector<1x128xf32> to vector<16x128xf32>
    %226 = arith.addf %222, %225 : vector<16x128xf32>
    %cst_84 = arith.constant 0.000000e+00 : f32
    %227 = vector.broadcast %cst_84 : f32 to vector<16x128xf32>
    %228 = arith.maximumf %226, %227 : vector<16x128xf32>
    %c1_85 = arith.constant 1 : index
    %c0_86 = arith.constant 0 : index
    %c0_87 = arith.constant 0 : index
    %229 = vector.load %arg8[%c1_85, %c0_86, %c0_87] : memref<2x128x32xf32, #tpu.memory_space<vmem>>, vector<1x128x32xf32>
    %230 = vector.shape_cast %229 : vector<1x128x32xf32> to vector<128x32xf32>
    %cst_88 = arith.constant dense<0.000000e+00> : vector<16x32xf32>
    %231 = tpu.matmul %228, %230, %cst_88 {dimension_numbers = #tpu.dot_dimension_numbers<[1], [0], [0], [1], [0, 0, 1, 1], [], []>} : vector<16x128xf32>, vector<128x32xf32>, vector<16x32xf32> -> vector<16x32xf32>
    %c1_89 = arith.constant 1 : index
    %c0_90 = arith.constant 0 : index
    %c0_91 = arith.constant 0 : index
    %232 = vector.load %arg9[%c1_89, %c0_90, %c0_91] : memref<2x1x32xf32, #tpu.memory_space<vmem>>, vector<1x1x32xf32>
    %233 = vector.shape_cast %232 : vector<1x1x32xf32> to vector<1x32xf32>
    %234 = vector.broadcast %233 : vector<1x32xf32> to vector<16x32xf32>
    %235 = arith.addf %231, %234 : vector<16x32xf32>
    %236 = arith.addf %235, %218 : vector<16x32xf32>
    %c1_92 = arith.constant 1 : index
    %c0_93 = arith.constant 0 : index
    %c0_94 = arith.constant 0 : index
    %237 = vector.load %arg10[%c1_92, %c0_93, %c0_94] : memref<2x1x32xf32, #tpu.memory_space<vmem>>, vector<1x1x32xf32>
    %238 = vector.shape_cast %237 : vector<1x1x32xf32> to vector<1x32xf32>
    %c1_95 = arith.constant 1 : index
    %c0_96 = arith.constant 0 : index
    %c0_97 = arith.constant 0 : index
    %239 = vector.load %arg11[%c1_95, %c0_96, %c0_97] : memref<2x1x32xf32, #tpu.memory_space<vmem>>, vector<1x1x32xf32>
    %240 = vector.shape_cast %239 : vector<1x1x32xf32> to vector<1x32xf32>
    %cst_98 = arith.constant dense<0.000000e+00> : vector<16xf32>
    %241 = vector.multi_reduction <add>, %236, %cst_98 [1] : vector<16x32xf32> to vector<16xf32>
    %242 = vector.shape_cast %241 : vector<16xf32> to vector<16x1xf32>
    %cst_99 = arith.constant 3.200000e+01 : f32
    %243 = vector.broadcast %cst_99 : f32 to vector<16x1xf32>
    %244 = arith.divf %242, %243 : vector<16x1xf32>
    %245 = vector.broadcast %244 : vector<16x1xf32> to vector<16x32xf32>
    %246 = arith.subf %236, %245 : vector<16x32xf32>
    %247 = arith.mulf %246, %246 : vector<16x32xf32>
    %cst_100 = arith.constant dense<0.000000e+00> : vector<16xf32>
    %248 = vector.multi_reduction <add>, %247, %cst_100 [1] : vector<16x32xf32> to vector<16xf32>
    %249 = vector.shape_cast %248 : vector<16xf32> to vector<16x1xf32>
    %cst_101 = arith.constant 3.200000e+01 : f32
    %250 = vector.broadcast %cst_101 : f32 to vector<16x1xf32>
    %251 = arith.divf %249, %250 : vector<16x1xf32>
    %cst_102 = arith.constant 9.99999974E-6 : f32
    %252 = vector.broadcast %cst_102 : f32 to vector<16x1xf32>
    %253 = arith.addf %251, %252 : vector<16x1xf32>
    %254 = math.rsqrt %253 : vector<16x1xf32>
    %255 = vector.broadcast %254 : vector<16x1xf32> to vector<16x32xf32>
    %256 = arith.mulf %246, %255 : vector<16x32xf32>
    %257 = vector.broadcast %238 : vector<1x32xf32> to vector<16x32xf32>
    %258 = arith.mulf %256, %257 : vector<16x32xf32>
    %259 = vector.broadcast %240 : vector<1x32xf32> to vector<16x32xf32>
    %260 = arith.addf %258, %259 : vector<16x32xf32>
    %261 = vector.shape_cast %260 : vector<16x32xf32> to vector<2x8x32xf32>
    %cst_103 = arith.constant dense<0xFF800000> : vector<2x32xf32>
    %262 = vector.multi_reduction <maximumf>, %261, %cst_103 [1] : vector<2x8x32xf32> to vector<2x32xf32>
    %263 = arith.truncf %262 : vector<2x32xf32> to vector<2x32xbf16>
    %c0_104 = arith.constant 0 : index
    %c0_105 = arith.constant 0 : index
    %264 = vector.load %arg12[%c0_104, %c0_105] : memref<32x128xbf16, #tpu.memory_space<vmem>>, vector<32x128xbf16>
    %cst_106 = arith.constant dense<0.000000e+00> : vector<2x128xf32>
    %265 = tpu.matmul %263, %264, %cst_106 {dimension_numbers = #tpu.dot_dimension_numbers<[1], [0], [0], [1], [0, 0, 1, 1], [], []>} : vector<2x32xbf16>, vector<32x128xbf16>, vector<2x128xf32> -> vector<2x128xf32>
    %c0_107 = arith.constant 0 : index
    %c0_108 = arith.constant 0 : index
    %266 = vector.load %arg13[%c0_107, %c0_108] : memref<1x128xf32, #tpu.memory_space<vmem>>, vector<1x128xf32>
    %267 = vector.broadcast %266 : vector<1x128xf32> to vector<2x128xf32>
    %268 = arith.addf %265, %267 : vector<2x128xf32>
    %cst_109 = arith.constant dense<0xFF800000> : vector<2xf32>
    %269 = vector.multi_reduction <maximumf>, %268, %cst_109 [1] : vector<2x128xf32> to vector<2xf32>
    %270 = vector.shape_cast %269 : vector<2xf32> to vector<2x1xf32>
    %271 = vector.broadcast %270 : vector<2x1xf32> to vector<2x128xf32>
    %272 = arith.subf %268, %271 : vector<2x128xf32>
    %273 = math.exp %272 : vector<2x128xf32>
    %cst_110 = arith.constant dense<0.000000e+00> : vector<2xf32>
    %274 = vector.multi_reduction <add>, %273, %cst_110 [1] : vector<2x128xf32> to vector<2xf32>
    %275 = vector.shape_cast %274 : vector<2xf32> to vector<2x1xf32>
    %276 = math.log %275 : vector<2x1xf32>
    %277 = arith.addf %270, %276 : vector<2x1xf32>
    %278 = vector.broadcast %277 : vector<2x1xf32> to vector<2x128xf32>
    %279 = arith.subf %268, %278 : vector<2x128xf32>
    %c0_111 = arith.constant 0 : index
    %c0_112 = arith.constant 0 : index
    %280 = vector.load %arg14[%c0_111, %c0_112] : memref<2x128xf32, #tpu.memory_space<vmem>>, vector<2x128xf32>
    tpu.vector_store %arg14[%c0_111, %c0_112], %279 {strides = array<i32>} : memref<2x128xf32, #tpu.memory_space<vmem>>, vector<2x128xf32>,
    return
  }
}

</mosaic_0001>

<llo_original>
// kernel: ctransformer_forward.1
$region0: #{ctransformer_forward.1}
  #allocation0 [shape = 'u32[]', space=smem, size = 0x4, offset = 0x4, fixed_abs, tag = 'smem constant byte address 0x4 - core index']
  #allocation1 [shape = 'u32[72,128]{1,0:T(1,128)}', space=vmem, size = 0x9000, scoped, tag = 'internal scratch']
  %s0 = inlined_call_operand.vmem [shape: f32[16,32], index: 0, kind: input, shape index: {}]
  %s1 = inlined_call_operand.vmem [shape: bf16[2,32,96], index: 1, kind: input, shape index: {}]
  %s2 = inlined_call_operand.vmem [shape: f32[2,32,32], index: 2, kind: input, shape index: {}]
  %s3 = inlined_call_operand.vmem [shape: f32[2,1,32], index: 3, kind: input, shape index: {}]
  %s4 = inlined_call_operand.vmem [shape: f32[2,1,32], index: 4, kind: input, shape index: {}]
  %s5 = inlined_call_operand.vmem [shape: f32[2,1,32], index: 5, kind: input, shape index: {}]
  %s6 = inlined_call_operand.vmem [shape: bf16[2,32,128], index: 6, kind: input, shape index: {}]
  %s7 = inlined_call_operand.vmem [shape: f32[2,1,128], index: 7, kind: input, shape index: {}]
  %s8 = inlined_call_operand.vmem [shape: f32[2,128,32], index: 8, kind: input, shape index: {}]
  %s9 = inlined_call_operand.vmem [shape: f32[2,1,32], index: 9, kind: input, shape index: {}]
  %s10 = inlined_call_operand.vmem [shape: f32[2,1,32], index: 10, kind: input, shape index: {}]
  %s11 = inlined_call_operand.vmem [shape: f32[2,1,32], index: 11, kind: input, shape index: {}]
  %s12 = inlined_call_operand.vmem [shape: bf16[32,128], index: 12, kind: input, shape index: {}]
  %s13 = inlined_call_operand.vmem [shape: f32[1,128], index: 13, kind: input, shape index: {}]
  %s14 = inlined_call_operand.hbm [shape: f32[2,128], index: 14, kind: output, shape index: {}]
  %s15 = sld [smem:[#allocation0]]
  $region66: #{ctransformer_forward.1} parent=0
    _
  %s17 = ssub.s32 1, %s15
  %s18 = scalar_select 0, %s17, %s15
  $region1: #{ctransformer_forward.1} parent=0
    #allocation2 [shape = 'u8[1024]{0}', space=vmem, size = 0x400, scoped, tag = 'output window, operand 0, single buffered']
    #allocation3 [shape = 's32[1]{0}', space=sflag, size = 0x4, scoped, tag = 'scoped memory for ctransformer_forward.1']
    %19 = vsyncpa [#allocation3], 0
    // Predicated region
    $region2: #{ctransformer_forward.1} parent=1 // pred_check
      _
    $region3: #{ctransformer_forward.1} parent=1 // pred_check_branch
      %21 = sbr.rel (0) target = $region5
    $region4: #{ctransformer_forward.1} parent=1 // pred_region
      _
    $region5: #{ctransformer_forward.1} parent=1 // pred_fallthru
      _
    // Predicated region
    $region6: #{ctransformer_forward.1} parent=1 // pred_check
      _
    $region7: #{ctransformer_forward.1} parent=1 // pred_check_branch
      %23 = sbr.rel (0) target = $region9
    $region8: #{ctransformer_forward.1} parent=1 // pred_region
      _
    $region9: #{ctransformer_forward.1} parent=1 // pred_fallthru
      _
    // Predicated region
    $region10: #{ctransformer_forward.1} parent=1 // pred_check
      _
    $region11: #{ctransformer_forward.1} parent=1 // pred_check_branch
      %25 = sbr.rel (0) target = $region13
    $region12: #{ctransformer_forward.1} parent=1 // pred_region
      _
    $region13: #{ctransformer_forward.1} parent=1 // pred_fallthru
      _
    // Predicated region
    $region14: #{ctransformer_forward.1} parent=1 // pred_check
      _
    $region15: #{ctransformer_forward.1} parent=1 // pred_check_branch
      %27 = sbr.rel (0) target = $region17
    $region16: #{ctransformer_forward.1} parent=1 // pred_region
      _
    $region17: #{ctransformer_forward.1} parent=1 // pred_fallthru
      _
    // Predicated region
    $region18: #{ctransformer_forward.1} parent=1 // pred_check
      _
    $region19: #{ctransformer_forward.1} parent=1 // pred_check_branch
      %29 = sbr.rel (0) target = $region21
    $region20: #{ctransformer_forward.1} parent=1 // pred_region
      _
    $region21: #{ctransformer_forward.1} parent=1 // pred_fallthru
      _
    // Predicated region
    $region22: #{ctransformer_forward.1} parent=1 // pred_check
      _
    $region23: #{ctransformer_forward.1} parent=1 // pred_check_branch
      %31 = sbr.rel (0) target = $region25
    $region24: #{ctransformer_forward.1} parent=1 // pred_region
      _
    $region25: #{ctransformer_forward.1} parent=1 // pred_fallthru
      _
    // Predicated region
    $region26: #{ctransformer_forward.1} parent=1 // pred_check
      _
    $region27: #{ctransformer_forward.1} parent=1 // pred_check_branch
      %33 = sbr.rel (0) target = $region29
    $region28: #{ctransformer_forward.1} parent=1 // pred_region
      _
    $region29: #{ctransformer_forward.1} parent=1 // pred_fallthru
      _
    // Predicated region
    $region30: #{ctransformer_forward.1} parent=1 // pred_check
      _
    $region31: #{ctransformer_forward.1} parent=1 // pred_check_branch
      %35 = sbr.rel (0) target = $region33
    $region32: #{ctransformer_forward.1} parent=1 // pred_region
      _
    $region33: #{ctransformer_forward.1} parent=1 // pred_fallthru
      _
    // Predicated region
    $region34: #{ctransformer_forward.1} parent=1 // pred_check
      _
    $region35: #{ctransformer_forward.1} parent=1 // pred_check_branch
      %37 = sbr.rel (0) target = $region37
    $region36: #{ctransformer_forward.1} parent=1 // pred_region
      _
    $region37: #{ctransformer_forward.1} parent=1 // pred_fallthru
      _
    // Predicated region
    $region38: #{ctransformer_forward.1} parent=1 // pred_check
      _
    $region39: #{ctransformer_forward.1} parent=1 // pred_check_branch
      %39 = sbr.rel (0) target = $region41
    $region40: #{ctransformer_forward.1} parent=1 // pred_region
      _
    $region41: #{ctransformer_forward.1} parent=1 // pred_fallthru
      _
    // Predicated region
    $region42: #{ctransformer_forward.1} parent=1 // pred_check
      _
    $region43: #{ctransformer_forward.1} parent=1 // pred_check_branch
      %41 = sbr.rel (0) target = $region45
    $region44: #{ctransformer_forward.1} parent=1 // pred_region
      _
    $region45: #{ctransformer_forward.1} parent=1 // pred_fallthru
      _
    // Predicated region
    $region46: #{ctransformer_forward.1} parent=1 // pred_check
      _
    $region47: #{ctransformer_forward.1} parent=1 // pred_check_branch
      %43 = sbr.rel (0) target = $region49
    $region48: #{ctransformer_forward.1} parent=1 // pred_region
      _
    $region49: #{ctransformer_forward.1} parent=1 // pred_fallthru
      _
    // Predicated region
    $region50: #{ctransformer_forward.1} parent=1 // pred_check
      _
    $region51: #{ctransformer_forward.1} parent=1 // pred_check_branch
      %45 = sbr.rel (0) target = $region53
    $region52: #{ctransformer_forward.1} parent=1 // pred_region
      _
    $region53: #{ctransformer_forward.1} parent=1 // pred_fallthru
      _
    // Predicated region
    $region54: #{ctransformer_forward.1} parent=1 // pred_check
      _
    $region55: #{ctransformer_forward.1} parent=1 // pred_check_branch
      %47 = sbr.rel (0) target = $region57
    $region56: #{ctransformer_forward.1} parent=1 // pred_region
      _
    $region57: #{ctransformer_forward.1} parent=1 // pred_fallthru
      _
    %v49 = vld [vmem:[%s0] sm:$0xff]
    %v50 = vld [vmem:[%s0 + $0x8] sm:$0xff]
    %v51 = vpack.c.bf16 %v50, %v49
    %v52 = vld [vmem:[%s1] sm:$0xf]
    %v53 = vld [vmem:[%s1 + $0x4] sm:$0xf]
    %v54 = vld [vmem:[%s1 + $0x8] sm:$0xf]
    %v55 = vld [vmem:[%s1 + $0xc] sm:$0xf]
    %v60 = vunpack.c.l.b16 %v52
    %v61 = vunpack.c.l.b16 %v53
    %v62 = vunpack.c.l.b16 %v54
    %v63 = vunpack.c.l.b16 %v55
    %v64 = vpack.c.b16 %v61, %v60
    %v65 = vpack.c.b16 %v63, %v62
    %vm68 = vcmask 261120
    %v70 = vsel %vm68, %v51, 0
    %72 = vmatpush.bf16.msra.mxu0 0
    %73 = vmatpush.bf16.msra.mxu0 0
    %74 = vmatpush.bf16.msra.mxu0 0
    %75 = vmatpush.bf16.msra.mxu0 0
    %76 = vmatpush.bf16.msra.mxu0 0
    %77 = vmatpush.bf16.msra.mxu0 0
    %78 = vmatpush.bf16.msra.mxu0 %v65
    %79 = vmatpush.bf16.msra.mxu0 %v64
    %80 = vmatmul.bf16.gmra.mxu0 %v70
    %v81 = vpop.f32.mrf.mxu0
    %v82 = vadd.f32 0.0, %v81
    %v83 = vpop.f32.mrf.mxu0
    %v84 = vadd.f32 0.0, %v83
    %85 = vdwg.mxu0
    %88 = vrot.lane.b32.xlu0 %v82, 120
    %v89 = vpop.permute.xlu0 %88
    %90 = vrot.lane.b32.xlu0 %v84, 120
    %v91 = vpop.permute.xlu0 %90
    %92 = vrot.lane.b32.xlu0 %v82, 112
    %v93 = vpop.permute.xlu0 %92
    %94 = vrot.lane.b32.xlu0 %v84, 112
    %v95 = vpop.permute.xlu0 %94
    %96 = vrot.lane.b32.xlu0 %v82, 104
    %v97 = vpop.permute.xlu0 %96
    %98 = vrot.lane.b32.xlu0 %v84, 104
    %v99 = vpop.permute.xlu0 %98
    %100 = vrot.lane.b32.xlu0 %v82, 96
    %v101 = vpop.permute.xlu0 %100
    %vm102 = vcmask 64512
    %v103 = vsel %vm102, %v82, 0
    %v105 = vsel %vm102, %v101, 0
    %107 = vmatpush.xpose.msra.mxu0 0.0
    %108 = vmatpush.xpose.msra.mxu0 0.0
    %109 = vmatpush.xpose.msra.mxu0 0.0
    %110 = vmatpush.xpose.msra.mxu0 0.0
    %111 = vmatpush.xpose.msra.mxu0 0.0
    %112 = vmatpush.xpose.msra.mxu0 0.0
    %113 = vmatpush.xpose.msra.mxu0 0.0
    %114 = vmatpush.xpose.msra.mxu0 0.0
    %115 = vmatpush.xpose.msra.mxu0 0.0
    %116 = vmatpush.xpose.msra.mxu0 0.0
    %117 = vmatpush.xpose.msra.mxu0 0.0
    %118 = vmatpush.xpose.msra.mxu0 0.0
    %119 = vmatpush.xpose.msra.mxu0 0.0
    %120 = vmatpush.xpose.msra.mxu0 0.0
    %121 = vmatpush.xpose.msra.mxu0 0.0
    %122 = vmatpush.xpose.msra.mxu0 %v105
    %123 = vmatmul.f32.gmra.mxu0 %v103
    %v124 = vpop.f32.mrf.mxu0
    %v125 = vadd.f32 0.0, %v124
    %126 = vdwg.mxu0
    %127 = vrot.lane.b32.xlu0 %v84, 96
    %v128 = vpop.permute.xlu0 %127
    %v129 = vsel %vm102, %v84, 0
    %v131 = vsel %vm102, %v128, 0
    %133 = vmatpush.xpose.msra.mxu0 0.0
    %134 = vmatpush.xpose.msra.mxu0 0.0
    %135 = vmatpush.xpose.msra.mxu0 0.0
    %136 = vmatpush.xpose.msra.mxu0 0.0
    %137 = vmatpush.xpose.msra.mxu0 0.0
    %138 = vmatpush.xpose.msra.mxu0 0.0
    %139 = vmatpush.xpose.msra.mxu0 0.0
    %140 = vmatpush.xpose.msra.mxu0 0.0
    %141 = vmatpush.xpose.msra.mxu0 0.0
    %142 = vmatpush.xpose.msra.mxu0 0.0
    %143 = vmatpush.xpose.msra.mxu0 0.0
    %144 = vmatpush.xpose.msra.mxu0 0.0
    %145 = vmatpush.xpose.msra.mxu0 0.0
    %146 = vmatpush.xpose.msra.mxu0 0.0
    %147 = vmatpush.xpose.msra.mxu0 0.0
    %148 = vmatpush.xpose.msra.mxu0 %v131
    %149 = vmatmul.f32.gmra.mxu0 %v129
    %v150 = vpop.f32.mrf.mxu0
    %v151 = vadd.f32 0.0, %v150
    %152 = vdwg.mxu0
    %153 = vrot.lane.b32.xlu0 %v89, 96
    %v154 = vpop.permute.xlu0 %153
    %v155 = vsel %vm102, %v89, 0
    %v157 = vsel %vm102, %v154, 0
    %159 = vmatpush.xpose.msra.mxu0 0.0
    %160 = vmatpush.xpose.msra.mxu0 0.0
    %161 = vmatpush.xpose.msra.mxu0 0.0
    %162 = vmatpush.xpose.msra.mxu0 0.0
    %163 = vmatpush.xpose.msra.mxu0 0.0
    %164 = vmatpush.xpose.msra.mxu0 0.0
    %165 = vmatpush.xpose.msra.mxu0 0.0
    %166 = vmatpush.xpose.msra.mxu0 0.0
    %167 = vmatpush.xpose.msra.mxu0 0.0
    %168 = vmatpush.xpose.msra.mxu0 0.0
    %169 = vmatpush.xpose.msra.mxu0 0.0
    %170 = vmatpush.xpose.msra.mxu0 0.0
    %171 = vmatpush.xpose.msra.mxu0 0.0
    %172 = vmatpush.xpose.msra.mxu0 0.0
    %173 = vmatpush.xpose.msra.mxu0 0.0
    %174 = vmatpush.xpose.msra.mxu0 %v157
    %175 = vmatmul.f32.gmra.mxu0 %v155
    %v176 = vpop.f32.mrf.mxu0
    %v177 = vadd.f32 0.0, %v176
    %178 = vdwg.mxu0
    %179 = vrot.lane.b32.xlu0 %v91, 96
    %v180 = vpop.permute.xlu0 %179
    %v181 = vsel %vm102, %v91, 0
    %v183 = vsel %vm102, %v180, 0
    %185 = vmatpush.xpose.msra.mxu0 0.0
    %186 = vmatpush.xpose.msra.mxu0 0.0
    %187 = vmatpush.xpose.msra.mxu0 0.0
    %188 = vmatpush.xpose.msra.mxu0 0.0
    %189 = vmatpush.xpose.msra.mxu0 0.0
    %190 = vmatpush.xpose.msra.mxu0 0.0
    %191 = vmatpush.xpose.msra.mxu0 0.0
    %192 = vmatpush.xpose.msra.mxu0 0.0
    %193 = vmatpush.xpose.msra.mxu0 0.0
    %194 = vmatpush.xpose.msra.mxu0 0.0
    %195 = vmatpush.xpose.msra.mxu0 0.0
    %196 = vmatpush.xpose.msra.mxu0 0.0
    %197 = vmatpush.xpose.msra.mxu0 0.0
    %198 = vmatpush.xpose.msra.mxu0 0.0
    %199 = vmatpush.xpose.msra.mxu0 0.0
    %200 = vmatpush.xpose.msra.mxu0 %v183
    %201 = vmatmul.f32.gmra.mxu0 %v181
    %v202 = vpop.f32.mrf.mxu0
    %v203 = vadd.f32 0.0, %v202
    %204 = vdwg.mxu0
    %205 = vrot.lane.b32.xlu0 %v93, 96
    %v206 = vpop.permute.xlu0 %205
    %v207 = vsel %vm102, %v93, 0
    %v209 = vsel %vm102, %v206, 0
    %211 = vmatpush.xpose.msra.mxu0 0.0
    %212 = vmatpush.xpose.msra.mxu0 0.0
    %213 = vmatpush.xpose.msra.mxu0 0.0
    %214 = vmatpush.xpose.msra.mxu0 0.0
    %215 = vmatpush.xpose.msra.mxu0 0.0
    %216 = vmatpush.xpose.msra.mxu0 0.0
    %217 = vmatpush.xpose.msra.mxu0 0.0
    %218 = vmatpush.xpose.msra.mxu0 0.0
    %219 = vmatpush.xpose.msra.mxu0 0.0
    %220 = vmatpush.xpose.msra.mxu0 0.0
    %221 = vmatpush.xpose.msra.mxu0 0.0
    %222 = vmatpush.xpose.msra.mxu0 0.0
    %223 = vmatpush.xpose.msra.mxu0 0.0
    %224 = vmatpush.xpose.msra.mxu0 0.0
    %225 = vmatpush.xpose.msra.mxu0 0.0
    %226 = vmatpush.xpose.msra.mxu0 %v209
    %227 = vmatmul.f32.gmra.mxu0 %v207
    %v228 = vpop.f32.mrf.mxu0
    %v229 = vadd.f32 0.0, %v228
    %230 = vdwg.mxu0
    %231 = vrot.lane.b32.xlu0 %v95, 96
    %v232 = vpop.permute.xlu0 %231
    %v233 = vsel %vm102, %v95, 0
    %v235 = vsel %vm102, %v232, 0
    %237 = vmatpush.xpose.msra.mxu0 0.0
    %238 = vmatpush.xpose.msra.mxu0 0.0
    %239 = vmatpush.xpose.msra.mxu0 0.0
    %240 = vmatpush.xpose.msra.mxu0 0.0
    %241 = vmatpush.xpose.msra.mxu0 0.0
    %242 = vmatpush.xpose.msra.mxu0 0.0
    %243 = vmatpush.xpose.msra.mxu0 0.0
    %244 = vmatpush.xpose.msra.mxu0 0.0
    %245 = vmatpush.xpose.msra.mxu0 0.0
    %246 = vmatpush.xpose.msra.mxu0 0.0
    %247 = vmatpush.xpose.msra.mxu0 0.0
    %248 = vmatpush.xpose.msra.mxu0 0.0
    %249 = vmatpush.xpose.msra.mxu0 0.0
    %250 = vmatpush.xpose.msra.mxu0 0.0
    %251 = vmatpush.xpose.msra.mxu0 0.0
    %252 = vmatpush.xpose.msra.mxu0 %v235
    %253 = vmatmul.f32.gmra.mxu0 %v233
    %v254 = vpop.f32.mrf.mxu0
    %v255 = vadd.f32 0.0, %v254
    %256 = vdwg.mxu0
    %257 = vrot.lane.b32.xlu0 %v97, 96
    %v258 = vpop.permute.xlu0 %257
    %v259 = vsel %vm102, %v97, 0
    %v261 = vsel %vm102, %v258, 0
    %263 = vmatpush.xpose.msra.mxu0 0.0
    %264 = vmatpush.xpose.msra.mxu0 0.0
    %265 = vmatpush.xpose.msra.mxu0 0.0
    %266 = vmatpush.xpose.msra.mxu0 0.0
    %267 = vmatpush.xpose.msra.mxu0 0.0
    %268 = vmatpush.xpose.msra.mxu0 0.0
    %269 = vmatpush.xpose.msra.mxu0 0.0
    %270 = vmatpush.xpose.msra.mxu0 0.0
    %271 = vmatpush.xpose.msra.mxu0 0.0
    %272 = vmatpush.xpose.msra.mxu0 0.0
    %273 = vmatpush.xpose.msra.mxu0 0.0
    %274 = vmatpush.xpose.msra.mxu0 0.0
    %275 = vmatpush.xpose.msra.mxu0 0.0
    %276 = vmatpush.xpose.msra.mxu0 0.0
    %277 = vmatpush.xpose.msra.mxu0 0.0
    %278 = vmatpush.xpose.msra.mxu0 %v261
    %279 = vmatmul.f32.gmra.mxu0 %v259
    %v280 = vpop.f32.mrf.mxu0
    %v281 = vadd.f32 0.0, %v280
    %282 = vdwg.mxu0
    %283 = vrot.lane.b32.xlu0 %v99, 96
    %v284 = vpop.permute.xlu0 %283
    %v285 = vsel %vm102, %v99, 0
    %v287 = vsel %vm102, %v284, 0
    %289 = vmatpush.xpose.msra.mxu0 0.0
    %290 = vmatpush.xpose.msra.mxu0 0.0
    %291 = vmatpush.xpose.msra.mxu0 0.0
    %292 = vmatpush.xpose.msra.mxu0 0.0
    %293 = vmatpush.xpose.msra.mxu0 0.0
    %294 = vmatpush.xpose.msra.mxu0 0.0
    %295 = vmatpush.xpose.msra.mxu0 0.0
    %296 = vmatpush.xpose.msra.mxu0 0.0
    %297 = vmatpush.xpose.msra.mxu0 0.0
    %298 = vmatpush.xpose.msra.mxu0 0.0
    %299 = vmatpush.xpose.msra.mxu0 0.0
    %300 = vmatpush.xpose.msra.mxu0 0.0
    %301 = vmatpush.xpose.msra.mxu0 0.0
    %302 = vmatpush.xpose.msra.mxu0 0.0
    %303 = vmatpush.xpose.msra.mxu0 0.0
    %304 = vmatpush.xpose.msra.mxu0 %v287
    %305 = vmatmul.f32.gmra.mxu0 %v285
    %v306 = vpop.f32.mrf.mxu0
    %v307 = vadd.f32 0.0, %v306
    %308 = vdwg.mxu0
    %v309 = vsel %vm102, %v125, -inf
    %310 = vmax.xlane.f32.xlu0 %v309
    %v311 = vpop.xlane.xlu0 %310
    %v312 = vsel %vm102, %v151, -inf
    %313 = vmax.xlane.f32.xlu0 %v312
    %v314 = vpop.xlane.xlu0 %313
    %v315 = vsel %vm102, %v177, -inf
    %316 = vmax.xlane.f32.xlu0 %v315
    %v317 = vpop.xlane.xlu0 %316
    %v318 = vsel %vm102, %v203, -inf
    %319 = vmax.xlane.f32.xlu0 %v318
    %v320 = vpop.xlane.xlu0 %319
    %v321 = vsel %vm102, %v229, -inf
    %322 = vmax.xlane.f32.xlu0 %v321
    %v323 = vpop.xlane.xlu0 %322
    %v324 = vsel %vm102, %v255, -inf
    %325 = vmax.xlane.f32.xlu0 %v324
    %v326 = vpop.xlane.xlu0 %325
    %v327 = vsel %vm102, %v281, -inf
    %328 = vmax.xlane.f32.xlu0 %v327
    %v329 = vpop.xlane.xlu0 %328
    %v330 = vsel %vm102, %v307, -inf
    %331 = vmax.xlane.f32.xlu0 %v330
    %v332 = vpop.xlane.xlu0 %331
    %v333 = vsub.f32 %v125, %v311
    %v334 = vsub.f32 %v151, %v314
    %v335 = vsub.f32 %v177, %v317
    %v336 = vsub.f32 %v203, %v320
    %v337 = vsub.f32 %v229, %v323
    %v338 = vsub.f32 %v255, %v326
    %v339 = vsub.f32 %v281, %v329
    %v340 = vsub.f32 %v307, %v332
    %v341 = vmul.f32 %v333, 1.442695
    %v342 = vpow.pop %v341
    %v343 = vmul.f32 %v334, 1.442695
    %v344 = vpow.pop %v343
    %v345 = vmul.f32 %v335, 1.442695
    %v346 = vpow.pop %v345
    %v347 = vmul.f32 %v336, 1.442695
    %v348 = vpow.pop %v347
    %v349 = vmul.f32 %v337, 1.442695
    %v350 = vpow.pop %v349
    %v351 = vmul.f32 %v338, 1.442695
    %v352 = vpow.pop %v351
    %v353 = vmul.f32 %v339, 1.442695
    %v354 = vpow.pop %v353
    %v355 = vmul.f32 %v340, 1.442695
    %v356 = vpow.pop %v355
    %v357 = vsel %vm102, %v342, 0.0
    %358 = vadd.xlane.f32.xlu0 %v357
    %v359 = vpop.xlane.xlu0 %358
    %v360 = vsel %vm102, %v344, 0.0
    %361 = vadd.xlane.f32.xlu0 %v360
    %v362 = vpop.xlane.xlu0 %361
    %v363 = vsel %vm102, %v346, 0.0
    %364 = vadd.xlane.f32.xlu0 %v363
    %v365 = vpop.xlane.xlu0 %364
    %v366 = vsel %vm102, %v348, 0.0
    %367 = vadd.xlane.f32.xlu0 %v366
    %v368 = vpop.xlane.xlu0 %367
    %v369 = vsel %vm102, %v350, 0.0
    %370 = vadd.xlane.f32.xlu0 %v369
    %v371 = vpop.xlane.xlu0 %370
    %v372 = vsel %vm102, %v352, 0.0
    %373 = vadd.xlane.f32.xlu0 %v372
    %v374 = vpop.xlane.xlu0 %373
    %v375 = vsel %vm102, %v354, 0.0
    %376 = vadd.xlane.f32.xlu0 %v375
    %v377 = vpop.xlane.xlu0 %376
    %v378 = vsel %vm102, %v356, 0.0
    %379 = vadd.xlane.f32.xlu0 %v378
    %v380 = vpop.xlane.xlu0 %379
    %v381 = vrcp.pop %v359
    %v382 = vrcp.pop %v362
    %v383 = vrcp.pop %v365
    %v384 = vrcp.pop %v368
    %v385 = vrcp.pop %v371
    %v386 = vrcp.pop %v374
    %v387 = vrcp.pop %v377
    %v388 = vrcp.pop %v380
    %v389 = vmul.f32 %v342, %v381
    %v390 = vmul.f32 %v344, %v382
    %v391 = vmul.f32 %v346, %v383
    %v392 = vmul.f32 %v348, %v384
    %v393 = vmul.f32 %v350, %v385
    %v394 = vmul.f32 %v352, %v386
    %v395 = vmul.f32 %v354, %v387
    %v396 = vmul.f32 %v356, %v388
    %397 = vrot.lane.b32.xlu0 %v82, 64
    %v398 = vpop.permute.xlu0 %397
    %v401 = vsel %vm102, %v389, 0
    %403 = vmatpush.msra.mxu0 0.0
    %404 = vmatpush.msra.mxu0 0.0
    %405 = vmatpush.msra.mxu0 0.0
    %406 = vmatpush.msra.mxu0 0.0
    %407 = vmatpush.msra.mxu0 0.0
    %408 = vmatpush.msra.mxu0 0.0
    %409 = vmatpush.msra.mxu0 0.0
    %410 = vmatpush.msra.mxu0 0.0
    %411 = vmatpush.msra.mxu0 0.0
    %412 = vmatpush.msra.mxu0 0.0
    %413 = vmatpush.msra.mxu0 0.0
    %414 = vmatpush.msra.mxu0 0.0
    %415 = vmatpush.msra.mxu0 0.0
    %416 = vmatpush.msra.mxu0 0.0
    %417 = vmatpush.msra.mxu0 0.0
    %418 = vmatpush.msra.mxu0 %v398
    %419 = vmatmul.f32.gmra.mxu0 %v401
    %v420 = vpop.f32.mrf.mxu0
    %v421 = vadd.f32 0.0, %v420
    %422 = vdwg.mxu0
    %423 = vrot.lane.b32.xlu0 %v84, 64
    %v424 = vpop.permute.xlu0 %423
    %v427 = vsel %vm102, %v390, 0
    %429 = vmatpush.msra.mxu0 0.0
    %430 = vmatpush.msra.mxu0 0.0
    %431 = vmatpush.msra.mxu0 0.0
    %432 = vmatpush.msra.mxu0 0.0
    %433 = vmatpush.msra.mxu0 0.0
    %434 = vmatpush.msra.mxu0 0.0
    %435 = vmatpush.msra.mxu0 0.0
    %436 = vmatpush.msra.mxu0 0.0
    %437 = vmatpush.msra.mxu0 0.0
    %438 = vmatpush.msra.mxu0 0.0
    %439 = vmatpush.msra.mxu0 0.0
    %440 = vmatpush.msra.mxu0 0.0
    %441 = vmatpush.msra.mxu0 0.0
    %442 = vmatpush.msra.mxu0 0.0
    %443 = vmatpush.msra.mxu0 0.0
    %444 = vmatpush.msra.mxu0 %v424
    %445 = vmatmul.f32.gmra.mxu0 %v427
    %v446 = vpop.f32.mrf.mxu0
    %v447 = vadd.f32 0.0, %v446
    %448 = vdwg.mxu0
    %449 = vrot.lane.b32.xlu0 %v89, 64
    %v450 = vpop.permute.xlu0 %449
    %v453 = vsel %vm102, %v391, 0
    %455 = vmatpush.msra.mxu0 0.0
    %456 = vmatpush.msra.mxu0 0.0
    %457 = vmatpush.msra.mxu0 0.0
    %458 = vmatpush.msra.mxu0 0.0
    %459 = vmatpush.msra.mxu0 0.0
    %460 = vmatpush.msra.mxu0 0.0
    %461 = vmatpush.msra.mxu0 0.0
    %462 = vmatpush.msra.mxu0 0.0
    %463 = vmatpush.msra.mxu0 0.0
    %464 = vmatpush.msra.mxu0 0.0
    %465 = vmatpush.msra.mxu0 0.0
    %466 = vmatpush.msra.mxu0 0.0
    %467 = vmatpush.msra.mxu0 0.0
    %468 = vmatpush.msra.mxu0 0.0
    %469 = vmatpush.msra.mxu0 0.0
    %470 = vmatpush.msra.mxu0 %v450
    %471 = vmatmul.f32.gmra.mxu0 %v453
    %v472 = vpop.f32.mrf.mxu0
    %v473 = vadd.f32 0.0, %v472
    %474 = vdwg.mxu0
    %475 = vrot.lane.b32.xlu0 %v91, 64
    %v476 = vpop.permute.xlu0 %475
    %v479 = vsel %vm102, %v392, 0
    %481 = vmatpush.msra.mxu0 0.0
    %482 = vmatpush.msra.mxu0 0.0
    %483 = vmatpush.msra.mxu0 0.0
    %484 = vmatpush.msra.mxu0 0.0
    %485 = vmatpush.msra.mxu0 0.0
    %486 = vmatpush.msra.mxu0 0.0
    %487 = vmatpush.msra.mxu0 0.0
    %488 = vmatpush.msra.mxu0 0.0
    %489 = vmatpush.msra.mxu0 0.0
    %490 = vmatpush.msra.mxu0 0.0
    %491 = vmatpush.msra.mxu0 0.0
    %492 = vmatpush.msra.mxu0 0.0
    %493 = vmatpush.msra.mxu0 0.0
    %494 = vmatpush.msra.mxu0 0.0
    %495 = vmatpush.msra.mxu0 0.0
    %496 = vmatpush.msra.mxu0 %v476
    %497 = vmatmul.f32.gmra.mxu0 %v479
    %v498 = vpop.f32.mrf.mxu0
    %v499 = vadd.f32 0.0, %v498
    %500 = vdwg.mxu0
    %501 = vrot.lane.b32.xlu0 %v93, 64
    %v502 = vpop.permute.xlu0 %501
    %v505 = vsel %vm102, %v393, 0
    %507 = vmatpush.msra.mxu0 0.0
    %508 = vmatpush.msra.mxu0 0.0
    %509 = vmatpush.msra.mxu0 0.0
    %510 = vmatpush.msra.mxu0 0.0
    %511 = vmatpush.msra.mxu0 0.0
    %512 = vmatpush.msra.mxu0 0.0
    %513 = vmatpush.msra.mxu0 0.0
    %514 = vmatpush.msra.mxu0 0.0
    %515 = vmatpush.msra.mxu0 0.0
    %516 = vmatpush.msra.mxu0 0.0
    %517 = vmatpush.msra.mxu0 0.0
    %518 = vmatpush.msra.mxu0 0.0
    %519 = vmatpush.msra.mxu0 0.0
    %520 = vmatpush.msra.mxu0 0.0
    %521 = vmatpush.msra.mxu0 0.0
    %522 = vmatpush.msra.mxu0 %v502
    %523 = vmatmul.f32.gmra.mxu0 %v505
    %v524 = vpop.f32.mrf.mxu0
    %v525 = vadd.f32 0.0, %v524
    %526 = vdwg.mxu0
    %527 = vrot.lane.b32.xlu0 %v95, 64
    %v528 = vpop.permute.xlu0 %527
    %v531 = vsel %vm102, %v394, 0
    %533 = vmatpush.msra.mxu0 0.0
    %534 = vmatpush.msra.mxu0 0.0
    %535 = vmatpush.msra.mxu0 0.0
    %536 = vmatpush.msra.mxu0 0.0
    %537 = vmatpush.msra.mxu0 0.0
    %538 = vmatpush.msra.mxu0 0.0
    %539 = vmatpush.msra.mxu0 0.0
    %540 = vmatpush.msra.mxu0 0.0
    %541 = vmatpush.msra.mxu0 0.0
    %542 = vmatpush.msra.mxu0 0.0
    %543 = vmatpush.msra.mxu0 0.0
    %544 = vmatpush.msra.mxu0 0.0
    %545 = vmatpush.msra.mxu0 0.0
    %546 = vmatpush.msra.mxu0 0.0
    %547 = vmatpush.msra.mxu0 0.0
    %548 = vmatpush.msra.mxu0 %v528
    %549 = vmatmul.f32.gmra.mxu0 %v531
    %v550 = vpop.f32.mrf.mxu0
    %v551 = vadd.f32 0.0, %v550
    %552 = vdwg.mxu0
    %553 = vrot.lane.b32.xlu0 %v97, 64
    %v554 = vpop.permute.xlu0 %553
    %v557 = vsel %vm102, %v395, 0
    %559 = vmatpush.msra.mxu0 0.0
    %560 = vmatpush.msra.mxu0 0.0
    %561 = vmatpush.msra.mxu0 0.0
    %562 = vmatpush.msra.mxu0 0.0
    %563 = vmatpush.msra.mxu0 0.0
    %564 = vmatpush.msra.mxu0 0.0
    %565 = vmatpush.msra.mxu0 0.0
    %566 = vmatpush.msra.mxu0 0.0
    %567 = vmatpush.msra.mxu0 0.0
    %568 = vmatpush.msra.mxu0 0.0
    %569 = vmatpush.msra.mxu0 0.0
    %570 = vmatpush.msra.mxu0 0.0
    %571 = vmatpush.msra.mxu0 0.0
    %572 = vmatpush.msra.mxu0 0.0
    %573 = vmatpush.msra.mxu0 0.0
    %574 = vmatpush.msra.mxu0 %v554
    %575 = vmatmul.f32.gmra.mxu0 %v557
    %v576 = vpop.f32.mrf.mxu0
    %v577 = vadd.f32 0.0, %v576
    %578 = vdwg.mxu0
    %579 = vrot.lane.b32.xlu0 %v99, 64
    %v580 = vpop.permute.xlu0 %579
    %v583 = vsel %vm102, %v396, 0
    %585 = vmatpush.msra.mxu0 0.0
    %586 = vmatpush.msra.mxu0 0.0
    %587 = vmatpush.msra.mxu0 0.0
    %588 = vmatpush.msra.mxu0 0.0
    %589 = vmatpush.msra.mxu0 0.0
    %590 = vmatpush.msra.mxu0 0.0
    %591 = vmatpush.msra.mxu0 0.0
    %592 = vmatpush.msra.mxu0 0.0
    %593 = vmatpush.msra.mxu0 0.0
    %594 = vmatpush.msra.mxu0 0.0
    %595 = vmatpush.msra.mxu0 0.0
    %596 = vmatpush.msra.mxu0 0.0
    %597 = vmatpush.msra.mxu0 0.0
    %598 = vmatpush.msra.mxu0 0.0
    %599 = vmatpush.msra.mxu0 0.0
    %600 = vmatpush.msra.mxu0 %v580
    %601 = vmatmul.f32.gmra.mxu0 %v583
    %v602 = vpop.f32.mrf.mxu0
    %v603 = vadd.f32 0.0, %v602
    %604 = vdwg.mxu0
    %607 = vrot.lane.b32.xlu0 %v473, 8
    %v608 = vpop.permute.xlu0 %607
    %609 = vrot.lane.b32.xlu0 %v499, 8
    %v610 = vpop.permute.xlu0 %609
    %615 = vrot.lane.b32.xlu0 %v525, 16
    %v616 = vpop.permute.xlu0 %615
    %617 = vrot.lane.b32.xlu0 %v551, 16
    %v618 = vpop.permute.xlu0 %617
    %623 = vrot.lane.b32.xlu0 %v577, 24
    %v624 = vpop.permute.xlu0 %623
    %625 = vrot.lane.b32.xlu0 %v603, 24
    %v626 = vpop.permute.xlu0 %625
    %v629 = vsel %vm102, %v421, %v608
    %v630 = vsel %vm102, %v447, %v610
    %vm631 = vcmask 130048
    %v632 = vsel %vm631, %v629, %v616
    %v633 = vsel %vm631, %v630, %v618
    %vm634 = vcmask 195584
    %v635 = vsel %vm634, %v632, %v624
    %v636 = vsel %vm634, %v633, %v626
    %v637 = vld [vmem:[%s2] sm:$0xff]
    %v638 = vld [vmem:[%s2 + $0x8] sm:$0xff]
    %v639 = vld [vmem:[%s2 + $0x10] sm:$0xff]
    %v640 = vld [vmem:[%s2 + $0x18] sm:$0xff]
    %v641 = vld [vmem:[%s3] sm:$0x1]
    %v643 = vperm.slane %v641, 0
    %v646 = vsel %vm68, %v635, 0
    %v649 = vsel %vm68, %v636, 0
    %651 = vmatpush.msra.mxu0 0.0
    %652 = vmatpush.msra.mxu0 0.0
    %653 = vmatpush.msra.mxu0 0.0
    %654 = vmatpush.msra.mxu0 0.0
    %655 = vmatpush.msra.mxu0 0.0
    %656 = vmatpush.msra.mxu0 0.0
    %657 = vmatpush.msra.mxu0 0.0
    %658 = vmatpush.msra.mxu0 0.0
    %659 = vmatpush.msra.mxu0 0.0
    %660 = vmatpush.msra.mxu0 0.0
    %661 = vmatpush.msra.mxu0 0.0
    %662 = vmatpush.msra.mxu0 0.0
    %663 = vmatpush.msra.mxu0 %v640
    %664 = vmatpush.msra.mxu0 %v639
    %665 = vmatpush.msra.mxu0 %v638
    %666 = vmatpush.msra.mxu0 %v637
    %667 = vmatmul.f32.gmra.mxu0 %v646
    %v668 = vpop.f32.mrf.mxu0
    %v669 = vadd.f32 %v643, %v668
    %670 = vmatmul.f32.gmra.mxu0 %v649
    %v671 = vpop.f32.mrf.mxu0
    %v672 = vadd.f32 %v643, %v671
    %673 = vdwg.mxu0
    %v674 = vadd.f32 %v669, %v49
    %v675 = vadd.f32 %v672, %v50
    %v676 = vld [vmem:[%s4] sm:$0x1]
    %v677 = vld [vmem:[%s5] sm:$0x1]
    %v678 = vsel %vm68, %v674, 0.0
    %679 = vadd.xlane.f32.xlu0 %v678
    %v680 = vpop.xlane.xlu0 %679
    %v681 = vsel %vm68, %v675, 0.0
    %682 = vadd.xlane.f32.xlu0 %v681
    %v683 = vpop.xlane.xlu0 %682
    %v684 = vrcp.pop 32.0
    %v685 = vmul.f32 32.0, %v684
    %v686 = vsub.f32 1.0, %v685
    %v687 = vmul.f32 %v684, %v686
    %v688 = vadd.f32 %v684, %v687
    %vm689 = vweird.f32 %v684
    %v690 = vsel %vm689, %v684, %v688
    %v691 = vmul.f32 %v680, %v690
    %v692 = vmul.f32 %v683, %v690
    %v693 = vsub.f32 %v674, %v691
    %v694 = vsub.f32 %v675, %v692
    %v695 = vmul.f32 %v693, %v693
    %v696 = vmul.f32 %v694, %v694
    %v697 = vsel %vm68, %v695, 0.0
    %698 = vadd.xlane.f32.xlu0 %v697
    %v699 = vpop.xlane.xlu0 %698
    %v700 = vsel %vm68, %v696, 0.0
    %701 = vadd.xlane.f32.xlu0 %v700
    %v702 = vpop.xlane.xlu0 %701
    %v703 = vmul.f32 %v699, %v690
    %v704 = vmul.f32 %v702, %v690
    %v705 = vadd.f32 %v703, 1e-05
    %v706 = vadd.f32 %v704, 1e-05
    %v707 = vrsqrt.pop %v705
    %v708 = vmul.f32 %v707, %v705
    %v709 = vmul.f32 %v708, %v707
    %v710 = vmul.f32 0.5, %v709
    %v711 = vsub.f32 1.5, %v710
    %v712 = vmul.f32 %v707, %v711
    %vm713 = vweird.f32 %v705
    %vm714 = vweird.f32 %v707
    %vm715 = vmor %vm713, %vm714
    %v716 = vsel %vm715, %v707, %v712
    %v717 = vrsqrt.pop %v706
    %v718 = vmul.f32 %v717, %v706
    %v719 = vmul.f32 %v718, %v717
    %v720 = vmul.f32 0.5, %v719
    %v721 = vsub.f32 1.5, %v720
    %v722 = vmul.f32 %v717, %v721
    %vm723 = vweird.f32 %v706
    %vm724 = vweird.f32 %v717
    %vm725 = vmor %vm723, %vm724
    %v726 = vsel %vm725, %v717, %v722
    %v727 = vmul.f32 %v693, %v716
    %v728 = vmul.f32 %v694, %v726
    %v730 = vperm.slane %v676, 0
    %v732 = vmul.f32 %v727, %v730
    %v733 = vmul.f32 %v728, %v730
    %v735 = vperm.slane %v677, 0
    %v737 = vadd.f32 %v732, %v735
    %v738 = vadd.f32 %v733, %v735
    %v739 = vpack.c.bf16 %v738, %v737
    %v740 = vld [vmem:[%s6] sm:$0xf]
    %v741 = vld [vmem:[%s6 + $0x4] sm:$0xf]
    %v742 = vld [vmem:[%s6 + $0x8] sm:$0xf]
    %v743 = vld [vmem:[%s6 + $0xc] sm:$0xf]
    %v744 = vld [vmem:[%s7] sm:$0x1]
    %v746 = vperm.slane %v744, 0
    %v752 = vunpack.c.l.b16 %v740
    %v753 = vunpack.c.l.b16 %v741
    %v754 = vunpack.c.l.b16 %v742
    %v755 = vunpack.c.l.b16 %v743
    %v756 = vpack.c.b16 %v753, %v752
    %v757 = vpack.c.b16 %v755, %v754
    %v761 = vsel %vm68, %v739, 0
    %763 = vmatpush.bf16.msra.mxu0 0
    %764 = vmatpush.bf16.msra.mxu0 0
    %765 = vmatpush.bf16.msra.mxu0 0
    %766 = vmatpush.bf16.msra.mxu0 0
    %767 = vmatpush.bf16.msra.mxu0 0
    %768 = vmatpush.bf16.msra.mxu0 0
    %769 = vmatpush.bf16.msra.mxu0 %v757
    %770 = vmatpush.bf16.msra.mxu0 %v756
    %771 = vmatmul.bf16.gmra.mxu0 %v761
    %v772 = vpop.f32.mrf.mxu0
    %v773 = vadd.f32 %v746, %v772
    %v774 = vpop.f32.mrf.mxu0
    %v775 = vadd.f32 %v746, %v774
    %776 = vdwg.mxu0
    %v777 = vmax.f32 %v773, 0.0
    %v778 = vmax.f32 %v775, 0.0
    %v779 = vld [vmem:[%s8] sm:$0xff]
    %v780 = vld [vmem:[%s8 + $0x8] sm:$0xff]
    %v781 = vld [vmem:[%s8 + $0x10] sm:$0xff]
    %v782 = vld [vmem:[%s8 + $0x18] sm:$0xff]
    %v783 = vld [vmem:[%s8 + $0x20] sm:$0xff]
    %v784 = vld [vmem:[%s8 + $0x28] sm:$0xff]
    %v785 = vld [vmem:[%s8 + $0x30] sm:$0xff]
    %v786 = vld [vmem:[%s8 + $0x38] sm:$0xff]
    %v787 = vld [vmem:[%s8 + $0x40] sm:$0xff]
    %v788 = vld [vmem:[%s8 + $0x48] sm:$0xff]
    %v789 = vld [vmem:[%s8 + $0x50] sm:$0xff]
    %v790 = vld [vmem:[%s8 + $0x58] sm:$0xff]
    %v791 = vld [vmem:[%s8 + $0x60] sm:$0xff]
    %v792 = vld [vmem:[%s8 + $0x68] sm:$0xff]
    %v793 = vld [vmem:[%s8 + $0x70] sm:$0xff]
    %v794 = vld [vmem:[%s8 + $0x78] sm:$0xff]
    %v795 = vld [vmem:[%s9] sm:$0x1]
    %v797 = vperm.slane %v795, 0
    %799 = vmatpush.msra.mxu0 %v794
    %800 = vmatpush.msra.mxu0 %v793
    %801 = vmatpush.msra.mxu0 %v792
    %802 = vmatpush.msra.mxu0 %v791
    %803 = vmatpush.msra.mxu0 %v790
    %804 = vmatpush.msra.mxu0 %v789
    %805 = vmatpush.msra.mxu0 %v788
    %806 = vmatpush.msra.mxu0 %v787
    %807 = vmatpush.msra.mxu0 %v786
    %808 = vmatpush.msra.mxu0 %v785
    %809 = vmatpush.msra.mxu0 %v784
    %810 = vmatpush.msra.mxu0 %v783
    %811 = vmatpush.msra.mxu0 %v782
    %812 = vmatpush.msra.mxu0 %v781
    %813 = vmatpush.msra.mxu0 %v780
    %814 = vmatpush.msra.mxu0 %v779
    %815 = vmatmul.f32.gmra.mxu0 %v777
    %v816 = vpop.f32.mrf.mxu0
    %v817 = vadd.f32 %v797, %v816
    %818 = vmatmul.f32.gmra.mxu0 %v778
    %v819 = vpop.f32.mrf.mxu0
    %v820 = vadd.f32 %v797, %v819
    %821 = vdwg.mxu0
    %v822 = vadd.f32 %v817, %v737
    %v823 = vadd.f32 %v820, %v738
    %v824 = vld [vmem:[%s10] sm:$0x1]
    %v825 = vld [vmem:[%s11] sm:$0x1]
    %v826 = vsel %vm68, %v822, 0.0
    %827 = vadd.xlane.f32.xlu0 %v826
    %v828 = vpop.xlane.xlu0 %827
    %v829 = vsel %vm68, %v823, 0.0
    %830 = vadd.xlane.f32.xlu0 %v829
    %v831 = vpop.xlane.xlu0 %830
    %v832 = vmul.f32 %v828, %v690
    %v833 = vmul.f32 %v831, %v690
    %v834 = vsub.f32 %v822, %v832
    %v835 = vsub.f32 %v823, %v833
    %v836 = vmul.f32 %v834, %v834
    %v837 = vmul.f32 %v835, %v835
    %v838 = vsel %vm68, %v836, 0.0
    %839 = vadd.xlane.f32.xlu0 %v838
    %v840 = vpop.xlane.xlu0 %839
    %v841 = vsel %vm68, %v837, 0.0
    %842 = vadd.xlane.f32.xlu0 %v841
    %v843 = vpop.xlane.xlu0 %842
    %v844 = vmul.f32 %v840, %v690
    %v845 = vmul.f32 %v843, %v690
    %v846 = vadd.f32 %v844, 1e-05
    %v847 = vadd.f32 %v845, 1e-05
    %v848 = vrsqrt.pop %v846
    %v849 = vmul.f32 %v848, %v846
    %v850 = vmul.f32 %v849, %v848
    %v851 = vmul.f32 0.5, %v850
    %v852 = vsub.f32 1.5, %v851
    %v853 = vmul.f32 %v848, %v852
    %vm854 = vweird.f32 %v846
    %vm855 = vweird.f32 %v848
    %vm856 = vmor %vm854, %vm855
    %v857 = vsel %vm856, %v848, %v853
    %v858 = vrsqrt.pop %v847
    %v859 = vmul.f32 %v858, %v847
    %v860 = vmul.f32 %v859, %v858
    %v861 = vmul.f32 0.5, %v860
    %v862 = vsub.f32 1.5, %v861
    %v863 = vmul.f32 %v858, %v862
    %vm864 = vweird.f32 %v847
    %vm865 = vweird.f32 %v858
    %vm866 = vmor %vm864, %vm865
    %v867 = vsel %vm866, %v858, %v863
    %v868 = vmul.f32 %v834, %v857
    %v869 = vmul.f32 %v835, %v867
    %v871 = vperm.slane %v824, 0
    %v873 = vmul.f32 %v868, %v871
    %v874 = vmul.f32 %v869, %v871
    %v876 = vperm.slane %v825, 0
    %v878 = vadd.f32 %v873, %v876
    %v879 = vadd.f32 %v874, %v876
    %v880 = vpack.c.bf16 %v879, %v878
    %s881 = scalar_lea.vmem %s1, 16
    %v882 = vld [vmem:[%s881] sm:$0xf]
    %v883 = vld [vmem:[%s881 + $0x4] sm:$0xf]
    %v884 = vld [vmem:[%s881 + $0x8] sm:$0xf]
    %v885 = vld [vmem:[%s881 + $0xc] sm:$0xf]
    %v890 = vunpack.c.l.b16 %v882
    %v891 = vunpack.c.l.b16 %v883
    %v892 = vunpack.c.l.b16 %v884
    %v893 = vunpack.c.l.b16 %v885
    %v894 = vpack.c.b16 %v891, %v890
    %v895 = vpack.c.b16 %v893, %v892
    %v899 = vsel %vm68, %v880, 0
    %901 = vmatpush.bf16.msra.mxu0 0
    %902 = vmatpush.bf16.msra.mxu0 0
    %903 = vmatpush.bf16.msra.mxu0 0
    %904 = vmatpush.bf16.msra.mxu0 0
    %905 = vmatpush.bf16.msra.mxu0 0
    %906 = vmatpush.bf16.msra.mxu0 0
    %907 = vmatpush.bf16.msra.mxu0 %v895
    %908 = vmatpush.bf16.msra.mxu0 %v894
    %909 = vmatmul.bf16.gmra.mxu0 %v899
    %v910 = vpop.f32.mrf.mxu0
    %v911 = vadd.f32 0.0, %v910
    %v912 = vpop.f32.mrf.mxu0
    %v913 = vadd.f32 0.0, %v912
    %914 = vdwg.mxu0
    %917 = vrot.lane.b32.xlu0 %v911, 120
    %v918 = vpop.permute.xlu0 %917
    %919 = vrot.lane.b32.xlu0 %v913, 120
    %v920 = vpop.permute.xlu0 %919
    %921 = vrot.lane.b32.xlu0 %v911, 112
    %v922 = vpop.permute.xlu0 %921
    %923 = vrot.lane.b32.xlu0 %v913, 112
    %v924 = vpop.permute.xlu0 %923
    %925 = vrot.lane.b32.xlu0 %v911, 104
    %v926 = vpop.permute.xlu0 %925
    %927 = vrot.lane.b32.xlu0 %v913, 104
    %v928 = vpop.permute.xlu0 %927
    %929 = vrot.lane.b32.xlu0 %v911, 96
    %v930 = vpop.permute.xlu0 %929
    %v931 = vsel %vm102, %v911, 0
    %v933 = vsel %vm102, %v930, 0
    %935 = vmatpush.xpose.msra.mxu0 0.0
    %936 = vmatpush.xpose.msra.mxu0 0.0
    %937 = vmatpush.xpose.msra.mxu0 0.0
    %938 = vmatpush.xpose.msra.mxu0 0.0
    %939 = vmatpush.xpose.msra.mxu0 0.0
    %940 = vmatpush.xpose.msra.mxu0 0.0
    %941 = vmatpush.xpose.msra.mxu0 0.0
    %942 = vmatpush.xpose.msra.mxu0 0.0
    %943 = vmatpush.xpose.msra.mxu0 0.0
    %944 = vmatpush.xpose.msra.mxu0 0.0
    %945 = vmatpush.xpose.msra.mxu0 0.0
    %946 = vmatpush.xpose.msra.mxu0 0.0
    %947 = vmatpush.xpose.msra.mxu0 0.0
    %948 = vmatpush.xpose.msra.mxu0 0.0
    %949 = vmatpush.xpose.msra.mxu0 0.0
    %950 = vmatpush.xpose.msra.mxu0 %v933
    %951 = vmatmul.f32.gmra.mxu0 %v931
    %v952 = vpop.f32.mrf.mxu0
    %v953 = vadd.f32 0.0, %v952
    %954 = vdwg.mxu0
    %955 = vrot.lane.b32.xlu0 %v913, 96
    %v956 = vpop.permute.xlu0 %955
    %v957 = vsel %vm102, %v913, 0
    %v959 = vsel %vm102, %v956, 0
    %961 = vmatpush.xpose.msra.mxu0 0.0
    %962 = vmatpush.xpose.msra.mxu0 0.0
    %963 = vmatpush.xpose.msra.mxu0 0.0
    %964 = vmatpush.xpose.msra.mxu0 0.0
    %965 = vmatpush.xpose.msra.mxu0 0.0
    %966 = vmatpush.xpose.msra.mxu0 0.0
    %967 = vmatpush.xpose.msra.mxu0 0.0
    %968 = vmatpush.xpose.msra.mxu0 0.0
    %969 = vmatpush.xpose.msra.mxu0 0.0
    %970 = vmatpush.xpose.msra.mxu0 0.0
    %971 = vmatpush.xpose.msra.mxu0 0.0
    %972 = vmatpush.xpose.msra.mxu0 0.0
    %973 = vmatpush.xpose.msra.mxu0 0.0
    %974 = vmatpush.xpose.msra.mxu0 0.0
    %975 = vmatpush.xpose.msra.mxu0 0.0
    %976 = vmatpush.xpose.msra.mxu0 %v959
    %977 = vmatmul.f32.gmra.mxu0 %v957
    %v978 = vpop.f32.mrf.mxu0
    %v979 = vadd.f32 0.0, %v978
    %980 = vdwg.mxu0
    %981 = vrot.lane.b32.xlu0 %v918, 96
    %v982 = vpop.permute.xlu0 %981
    %v983 = vsel %vm102, %v918, 0
    %v985 = vsel %vm102, %v982, 0
    %987 = vmatpush.xpose.msra.mxu0 0.0
    %988 = vmatpush.xpose.msra.mxu0 0.0
    %989 = vmatpush.xpose.msra.mxu0 0.0
    %990 = vmatpush.xpose.msra.mxu0 0.0
    %991 = vmatpush.xpose.msra.mxu0 0.0
    %992 = vmatpush.xpose.msra.mxu0 0.0
    %993 = vmatpush.xpose.msra.mxu0 0.0
    %994 = vmatpush.xpose.msra.mxu0 0.0
    %995 = vmatpush.xpose.msra.mxu0 0.0
    %996 = vmatpush.xpose.msra.mxu0 0.0
    %997 = vmatpush.xpose.msra.mxu0 0.0
    %998 = vmatpush.xpose.msra.mxu0 0.0
    %999 = vmatpush.xpose.msra.mxu0 0.0
    %1000 = vmatpush.xpose.msra.mxu0 0.0
    %1001 = vmatpush.xpose.msra.mxu0 0.0
    %1002 = vmatpush.xpose.msra.mxu0 %v985
    %1003 = vmatmul.f32.gmra.mxu0 %v983
    %v1004 = vpop.f32.mrf.mxu0
    %v1005 = vadd.f32 0.0, %v1004
    %1006 = vdwg.mxu0
    %1007 = vrot.lane.b32.xlu0 %v920, 96
    %v1008 = vpop.permute.xlu0 %1007
    %v1009 = vsel %vm102, %v920, 0
    %v1011 = vsel %vm102, %v1008, 0
    %1013 = vmatpush.xpose.msra.mxu0 0.0
    %1014 = vmatpush.xpose.msra.mxu0 0.0
    %1015 = vmatpush.xpose.msra.mxu0 0.0
    %1016 = vmatpush.xpose.msra.mxu0 0.0
    %1017 = vmatpush.xpose.msra.mxu0 0.0
    %1018 = vmatpush.xpose.msra.mxu0 0.0
    %1019 = vmatpush.xpose.msra.mxu0 0.0
    %1020 = vmatpush.xpose.msra.mxu0 0.0
    %1021 = vmatpush.xpose.msra.mxu0 0.0
    %1022 = vmatpush.xpose.msra.mxu0 0.0
    %1023 = vmatpush.xpose.msra.mxu0 0.0
    %1024 = vmatpush.xpose.msra.mxu0 0.0
    %1025 = vmatpush.xpose.msra.mxu0 0.0
    %1026 = vmatpush.xpose.msra.mxu0 0.0
    %1027 = vmatpush.xpose.msra.mxu0 0.0
    %1028 = vmatpush.xpose.msra.mxu0 %v1011
    %1029 = vmatmul.f32.gmra.mxu0 %v1009
    %v1030 = vpop.f32.mrf.mxu0
    %v1031 = vadd.f32 0.0, %v1030
    %1032 = vdwg.mxu0
    %1033 = vrot.lane.b32.xlu0 %v922, 96
    %v1034 = vpop.permute.xlu0 %1033
    %v1035 = vsel %vm102, %v922, 0
    %v1037 = vsel %vm102, %v1034, 0
    %1039 = vmatpush.xpose.msra.mxu0 0.0
    %1040 = vmatpush.xpose.msra.mxu0 0.0
    %1041 = vmatpush.xpose.msra.mxu0 0.0
    %1042 = vmatpush.xpose.msra.mxu0 0.0
    %1043 = vmatpush.xpose.msra.mxu0 0.0
    %1044 = vmatpush.xpose.msra.mxu0 0.0
    %1045 = vmatpush.xpose.msra.mxu0 0.0
    %1046 = vmatpush.xpose.msra.mxu0 0.0
    %1047 = vmatpush.xpose.msra.mxu0 0.0
    %1048 = vmatpush.xpose.msra.mxu0 0.0
    %1049 = vmatpush.xpose.msra.mxu0 0.0
    %1050 = vmatpush.xpose.msra.mxu0 0.0
    %1051 = vmatpush.xpose.msra.mxu0 0.0
    %1052 = vmatpush.xpose.msra.mxu0 0.0
    %1053 = vmatpush.xpose.msra.mxu0 0.0
    %1054 = vmatpush.xpose.msra.mxu0 %v1037
    %1055 = vmatmul.f32.gmra.mxu0 %v1035
    %v1056 = vpop.f32.mrf.mxu0
    %v1057 = vadd.f32 0.0, %v1056
    %1058 = vdwg.mxu0
    %1059 = vrot.lane.b32.xlu0 %v924, 96
    %v1060 = vpop.permute.xlu0 %1059
    %v1061 = vsel %vm102, %v924, 0
    %v1063 = vsel %vm102, %v1060, 0
    %1065 = vmatpush.xpose.msra.mxu0 0.0
    %1066 = vmatpush.xpose.msra.mxu0 0.0
    %1067 = vmatpush.xpose.msra.mxu0 0.0
    %1068 = vmatpush.xpose.msra.mxu0 0.0
    %1069 = vmatpush.xpose.msra.mxu0 0.0
    %1070 = vmatpush.xpose.msra.mxu0 0.0
    %1071 = vmatpush.xpose.msra.mxu0 0.0
    %1072 = vmatpush.xpose.msra.mxu0 0.0
    %1073 = vmatpush.xpose.msra.mxu0 0.0
    %1074 = vmatpush.xpose.msra.mxu0 0.0
    %1075 = vmatpush.xpose.msra.mxu0 0.0
    %1076 = vmatpush.xpose.msra.mxu0 0.0
    %1077 = vmatpush.xpose.msra.mxu0 0.0
    %1078 = vmatpush.xpose.msra.mxu0 0.0
    %1079 = vmatpush.xpose.msra.mxu0 0.0
    %1080 = vmatpush.xpose.msra.mxu0 %v1063
    %1081 = vmatmul.f32.gmra.mxu0 %v1061
    %v1082 = vpop.f32.mrf.mxu0
    %v1083 = vadd.f32 0.0, %v1082
    %1084 = vdwg.mxu0
    %1085 = vrot.lane.b32.xlu0 %v926, 96
    %v1086 = vpop.permute.xlu0 %1085
    %v1087 = vsel %vm102, %v926, 0
    %v1089 = vsel %vm102, %v1086, 0
    %1091 = vmatpush.xpose.msra.mxu0 0.0
    %1092 = vmatpush.xpose.msra.mxu0 0.0
    %1093 = vmatpush.xpose.msra.mxu0 0.0
    %1094 = vmatpush.xpose.msra.mxu0 0.0
    %1095 = vmatpush.xpose.msra.mxu0 0.0
    %1096 = vmatpush.xpose.msra.mxu0 0.0
    %1097 = vmatpush.xpose.msra.mxu0 0.0
    %1098 = vmatpush.xpose.msra.mxu0 0.0
    %1099 = vmatpush.xpose.msra.mxu0 0.0
    %1100 = vmatpush.xpose.msra.mxu0 0.0
    %1101 = vmatpush.xpose.msra.mxu0 0.0
    %1102 = vmatpush.xpose.msra.mxu0 0.0
    %1103 = vmatpush.xpose.msra.mxu0 0.0
    %1104 = vmatpush.xpose.msra.mxu0 0.0
    %1105 = vmatpush.xpose.msra.mxu0 0.0
    %1106 = vmatpush.xpose.msra.mxu0 %v1089
    %1107 = vmatmul.f32.gmra.mxu0 %v1087
    %v1108 = vpop.f32.mrf.mxu0
    %v1109 = vadd.f32 0.0, %v1108
    %1110 = vdwg.mxu0
    %1111 = vrot.lane.b32.xlu0 %v928, 96
    %v1112 = vpop.permute.xlu0 %1111
    %v1113 = vsel %vm102, %v928, 0
    %v1115 = vsel %vm102, %v1112, 0
    %1117 = vmatpush.xpose.msra.mxu0 0.0
    %1118 = vmatpush.xpose.msra.mxu0 0.0
    %1119 = vmatpush.xpose.msra.mxu0 0.0
    %1120 = vmatpush.xpose.msra.mxu0 0.0
    %1121 = vmatpush.xpose.msra.mxu0 0.0
    %1122 = vmatpush.xpose.msra.mxu0 0.0
    %1123 = vmatpush.xpose.msra.mxu0 0.0
    %1124 = vmatpush.xpose.msra.mxu0 0.0
    %1125 = vmatpush.xpose.msra.mxu0 0.0
    %1126 = vmatpush.xpose.msra.mxu0 0.0
    %1127 = vmatpush.xpose.msra.mxu0 0.0
    %1128 = vmatpush.xpose.msra.mxu0 0.0
    %1129 = vmatpush.xpose.msra.mxu0 0.0
    %1130 = vmatpush.xpose.msra.mxu0 0.0
    %1131 = vmatpush.xpose.msra.mxu0 0.0
    %1132 = vmatpush.xpose.msra.mxu0 %v1115
    %1133 = vmatmul.f32.gmra.mxu0 %v1113
    %v1134 = vpop.f32.mrf.mxu0
    %v1135 = vadd.f32 0.0, %v1134
    %1136 = vdwg.mxu0
    %v1137 = vsel %vm102, %v953, -inf
    %1138 = vmax.xlane.f32.xlu0 %v1137
    %v1139 = vpop.xlane.xlu0 %1138
    %v1140 = vsel %vm102, %v979, -inf
    %1141 = vmax.xlane.f32.xlu0 %v1140
    %v1142 = vpop.xlane.xlu0 %1141
    %v1143 = vsel %vm102, %v1005, -inf
    %1144 = vmax.xlane.f32.xlu0 %v1143
    %v1145 = vpop.xlane.xlu0 %1144
    %v1146 = vsel %vm102, %v1031, -inf
    %1147 = vmax.xlane.f32.xlu0 %v1146
    %v1148 = vpop.xlane.xlu0 %1147
    %v1149 = vsel %vm102, %v1057, -inf
    %1150 = vmax.xlane.f32.xlu0 %v1149
    %v1151 = vpop.xlane.xlu0 %1150
    %v1152 = vsel %vm102, %v1083, -inf
    %1153 = vmax.xlane.f32.xlu0 %v1152
    %v1154 = vpop.xlane.xlu0 %1153
    %v1155 = vsel %vm102, %v1109, -inf
    %1156 = vmax.xlane.f32.xlu0 %v1155
    %v1157 = vpop.xlane.xlu0 %1156
    %v1158 = vsel %vm102, %v1135, -inf
    %1159 = vmax.xlane.f32.xlu0 %v1158
    %v1160 = vpop.xlane.xlu0 %1159
    %v1161 = vsub.f32 %v953, %v1139
    %v1162 = vsub.f32 %v979, %v1142
    %v1163 = vsub.f32 %v1005, %v1145
    %v1164 = vsub.f32 %v1031, %v1148
    %v1165 = vsub.f32 %v1057, %v1151
    %v1166 = vsub.f32 %v1083, %v1154
    %v1167 = vsub.f32 %v1109, %v1157
    %v1168 = vsub.f32 %v1135, %v1160
    %v1169 = vmul.f32 %v1161, 1.442695
    %v1170 = vpow.pop %v1169
    %v1171 = vmul.f32 %v1162, 1.442695
    %v1172 = vpow.pop %v1171
    %v1173 = vmul.f32 %v1163, 1.442695
    %v1174 = vpow.pop %v1173
    %v1175 = vmul.f32 %v1164, 1.442695
    %v1176 = vpow.pop %v1175
    %v1177 = vmul.f32 %v1165, 1.442695
    %v1178 = vpow.pop %v1177
    %v1179 = vmul.f32 %v1166, 1.442695
    %v1180 = vpow.pop %v1179
    %v1181 = vmul.f32 %v1167, 1.442695
    %v1182 = vpow.pop %v1181
    %v1183 = vmul.f32 %v1168, 1.442695
    %v1184 = vpow.pop %v1183
    %v1185 = vsel %vm102, %v1170, 0.0
    %1186 = vadd.xlane.f32.xlu0 %v1185
    %v1187 = vpop.xlane.xlu0 %1186
    %v1188 = vsel %vm102, %v1172, 0.0
    %1189 = vadd.xlane.f32.xlu0 %v1188
    %v1190 = vpop.xlane.xlu0 %1189
    %v1191 = vsel %vm102, %v1174, 0.0
    %1192 = vadd.xlane.f32.xlu0 %v1191
    %v1193 = vpop.xlane.xlu0 %1192
    %v1194 = vsel %vm102, %v1176, 0.0
    %1195 = vadd.xlane.f32.xlu0 %v1194
    %v1196 = vpop.xlane.xlu0 %1195
    %v1197 = vsel %vm102, %v1178, 0.0
    %1198 = vadd.xlane.f32.xlu0 %v1197
    %v1199 = vpop.xlane.xlu0 %1198
    %v1200 = vsel %vm102, %v1180, 0.0
    %1201 = vadd.xlane.f32.xlu0 %v1200
    %v1202 = vpop.xlane.xlu0 %1201
    %v1203 = vsel %vm102, %v1182, 0.0
    %1204 = vadd.xlane.f32.xlu0 %v1203
    %v1205 = vpop.xlane.xlu0 %1204
    %v1206 = vsel %vm102, %v1184, 0.0
    %1207 = vadd.xlane.f32.xlu0 %v1206
    %v1208 = vpop.xlane.xlu0 %1207
    %v1209 = vrcp.pop %v1187
    %v1210 = vrcp.pop %v1190
    %v1211 = vrcp.pop %v1193
    %v1212 = vrcp.pop %v1196
    %v1213 = vrcp.pop %v1199
    %v1214 = vrcp.pop %v1202
    %v1215 = vrcp.pop %v1205
    %v1216 = vrcp.pop %v1208
    %v1217 = vmul.f32 %v1170, %v1209
    %v1218 = vmul.f32 %v1172, %v1210
    %v1219 = vmul.f32 %v1174, %v1211
    %v1220 = vmul.f32 %v1176, %v1212
    %v1221 = vmul.f32 %v1178, %v1213
    %v1222 = vmul.f32 %v1180, %v1214
    %v1223 = vmul.f32 %v1182, %v1215
    %v1224 = vmul.f32 %v1184, %v1216
    %1225 = vrot.lane.b32.xlu0 %v911, 64
    %v1226 = vpop.permute.xlu0 %1225
    %v1229 = vsel %vm102, %v1217, 0
    %1231 = vmatpush.msra.mxu0 0.0
    %1232 = vmatpush.msra.mxu0 0.0
    %1233 = vmatpush.msra.mxu0 0.0
    %1234 = vmatpush.msra.mxu0 0.0
    %1235 = vmatpush.msra.mxu0 0.0
    %1236 = vmatpush.msra.mxu0 0.0
    %1237 = vmatpush.msra.mxu0 0.0
    %1238 = vmatpush.msra.mxu0 0.0
    %1239 = vmatpush.msra.mxu0 0.0
    %1240 = vmatpush.msra.mxu0 0.0
    %1241 = vmatpush.msra.mxu0 0.0
    %1242 = vmatpush.msra.mxu0 0.0
    %1243 = vmatpush.msra.mxu0 0.0
    %1244 = vmatpush.msra.mxu0 0.0
    %1245 = vmatpush.msra.mxu0 0.0
    %1246 = vmatpush.msra.mxu0 %v1226
    %1247 = vmatmul.f32.gmra.mxu0 %v1229
    %v1248 = vpop.f32.mrf.mxu0
    %v1249 = vadd.f32 0.0, %v1248
    %1250 = vdwg.mxu0
    %1251 = vrot.lane.b32.xlu0 %v913, 64
    %v1252 = vpop.permute.xlu0 %1251
    %v1255 = vsel %vm102, %v1218, 0
    %1257 = vmatpush.msra.mxu0 0.0
    %1258 = vmatpush.msra.mxu0 0.0
    %1259 = vmatpush.msra.mxu0 0.0
    %1260 = vmatpush.msra.mxu0 0.0
    %1261 = vmatpush.msra.mxu0 0.0
    %1262 = vmatpush.msra.mxu0 0.0
    %1263 = vmatpush.msra.mxu0 0.0
    %1264 = vmatpush.msra.mxu0 0.0
    %1265 = vmatpush.msra.mxu0 0.0
    %1266 = vmatpush.msra.mxu0 0.0
    %1267 = vmatpush.msra.mxu0 0.0
    %1268 = vmatpush.msra.mxu0 0.0
    %1269 = vmatpush.msra.mxu0 0.0
    %1270 = vmatpush.msra.mxu0 0.0
    %1271 = vmatpush.msra.mxu0 0.0
    %1272 = vmatpush.msra.mxu0 %v1252
    %1273 = vmatmul.f32.gmra.mxu0 %v1255
    %v1274 = vpop.f32.mrf.mxu0
    %v1275 = vadd.f32 0.0, %v1274
    %1276 = vdwg.mxu0
    %1277 = vrot.lane.b32.xlu0 %v918, 64
    %v1278 = vpop.permute.xlu0 %1277
    %v1281 = vsel %vm102, %v1219, 0
    %1283 = vmatpush.msra.mxu0 0.0
    %1284 = vmatpush.msra.mxu0 0.0
    %1285 = vmatpush.msra.mxu0 0.0
    %1286 = vmatpush.msra.mxu0 0.0
    %1287 = vmatpush.msra.mxu0 0.0
    %1288 = vmatpush.msra.mxu0 0.0
    %1289 = vmatpush.msra.mxu0 0.0
    %1290 = vmatpush.msra.mxu0 0.0
    %1291 = vmatpush.msra.mxu0 0.0
    %1292 = vmatpush.msra.mxu0 0.0
    %1293 = vmatpush.msra.mxu0 0.0
    %1294 = vmatpush.msra.mxu0 0.0
    %1295 = vmatpush.msra.mxu0 0.0
    %1296 = vmatpush.msra.mxu0 0.0
    %1297 = vmatpush.msra.mxu0 0.0
    %1298 = vmatpush.msra.mxu0 %v1278
    %1299 = vmatmul.f32.gmra.mxu0 %v1281
    %v1300 = vpop.f32.mrf.mxu0
    %v1301 = vadd.f32 0.0, %v1300
    %1302 = vdwg.mxu0
    %1303 = vrot.lane.b32.xlu0 %v920, 64
    %v1304 = vpop.permute.xlu0 %1303
    %v1307 = vsel %vm102, %v1220, 0
    %1309 = vmatpush.msra.mxu0 0.0
    %1310 = vmatpush.msra.mxu0 0.0
    %1311 = vmatpush.msra.mxu0 0.0
    %1312 = vmatpush.msra.mxu0 0.0
    %1313 = vmatpush.msra.mxu0 0.0
    %1314 = vmatpush.msra.mxu0 0.0
    %1315 = vmatpush.msra.mxu0 0.0
    %1316 = vmatpush.msra.mxu0 0.0
    %1317 = vmatpush.msra.mxu0 0.0
    %1318 = vmatpush.msra.mxu0 0.0
    %1319 = vmatpush.msra.mxu0 0.0
    %1320 = vmatpush.msra.mxu0 0.0
    %1321 = vmatpush.msra.mxu0 0.0
    %1322 = vmatpush.msra.mxu0 0.0
    %1323 = vmatpush.msra.mxu0 0.0
    %1324 = vmatpush.msra.mxu0 %v1304
    %1325 = vmatmul.f32.gmra.mxu0 %v1307
    %v1326 = vpop.f32.mrf.mxu0
    %v1327 = vadd.f32 0.0, %v1326
    %1328 = vdwg.mxu0
    %1329 = vrot.lane.b32.xlu0 %v922, 64
    %v1330 = vpop.permute.xlu0 %1329
    %v1333 = vsel %vm102, %v1221, 0
    %1335 = vmatpush.msra.mxu0 0.0
    %1336 = vmatpush.msra.mxu0 0.0
    %1337 = vmatpush.msra.mxu0 0.0
    %1338 = vmatpush.msra.mxu0 0.0
    %1339 = vmatpush.msra.mxu0 0.0
    %1340 = vmatpush.msra.mxu0 0.0
    %1341 = vmatpush.msra.mxu0 0.0
    %1342 = vmatpush.msra.mxu0 0.0
    %1343 = vmatpush.msra.mxu0 0.0
    %1344 = vmatpush.msra.mxu0 0.0
    %1345 = vmatpush.msra.mxu0 0.0
    %1346 = vmatpush.msra.mxu0 0.0
    %1347 = vmatpush.msra.mxu0 0.0
    %1348 = vmatpush.msra.mxu0 0.0
    %1349 = vmatpush.msra.mxu0 0.0
    %1350 = vmatpush.msra.mxu0 %v1330
    %1351 = vmatmul.f32.gmra.mxu0 %v1333
    %v1352 = vpop.f32.mrf.mxu0
    %v1353 = vadd.f32 0.0, %v1352
    %1354 = vdwg.mxu0
    %1355 = vrot.lane.b32.xlu0 %v924, 64
    %v1356 = vpop.permute.xlu0 %1355
    %v1359 = vsel %vm102, %v1222, 0
    %1361 = vmatpush.msra.mxu0 0.0
    %1362 = vmatpush.msra.mxu0 0.0
    %1363 = vmatpush.msra.mxu0 0.0
    %1364 = vmatpush.msra.mxu0 0.0
    %1365 = vmatpush.msra.mxu0 0.0
    %1366 = vmatpush.msra.mxu0 0.0
    %1367 = vmatpush.msra.mxu0 0.0
    %1368 = vmatpush.msra.mxu0 0.0
    %1369 = vmatpush.msra.mxu0 0.0
    %1370 = vmatpush.msra.mxu0 0.0
    %1371 = vmatpush.msra.mxu0 0.0
    %1372 = vmatpush.msra.mxu0 0.0
    %1373 = vmatpush.msra.mxu0 0.0
    %1374 = vmatpush.msra.mxu0 0.0
    %1375 = vmatpush.msra.mxu0 0.0
    %1376 = vmatpush.msra.mxu0 %v1356
    %1377 = vmatmul.f32.gmra.mxu0 %v1359
    %v1378 = vpop.f32.mrf.mxu0
    %v1379 = vadd.f32 0.0, %v1378
    %1380 = vdwg.mxu0
    %1381 = vrot.lane.b32.xlu0 %v926, 64
    %v1382 = vpop.permute.xlu0 %1381
    %v1385 = vsel %vm102, %v1223, 0
    %1387 = vmatpush.msra.mxu0 0.0
    %1388 = vmatpush.msra.mxu0 0.0
    %1389 = vmatpush.msra.mxu0 0.0
    %1390 = vmatpush.msra.mxu0 0.0
    %1391 = vmatpush.msra.mxu0 0.0
    %1392 = vmatpush.msra.mxu0 0.0
    %1393 = vmatpush.msra.mxu0 0.0
    %1394 = vmatpush.msra.mxu0 0.0
    %1395 = vmatpush.msra.mxu0 0.0
    %1396 = vmatpush.msra.mxu0 0.0
    %1397 = vmatpush.msra.mxu0 0.0
    %1398 = vmatpush.msra.mxu0 0.0
    %1399 = vmatpush.msra.mxu0 0.0
    %1400 = vmatpush.msra.mxu0 0.0
    %1401 = vmatpush.msra.mxu0 0.0
    %1402 = vmatpush.msra.mxu0 %v1382
    %1403 = vmatmul.f32.gmra.mxu0 %v1385
    %v1404 = vpop.f32.mrf.mxu0
    %v1405 = vadd.f32 0.0, %v1404
    %1406 = vdwg.mxu0
    %1407 = vrot.lane.b32.xlu0 %v928, 64
    %v1408 = vpop.permute.xlu0 %1407
    %v1411 = vsel %vm102, %v1224, 0
    %1413 = vmatpush.msra.mxu0 0.0
    %1414 = vmatpush.msra.mxu0 0.0
    %1415 = vmatpush.msra.mxu0 0.0
    %1416 = vmatpush.msra.mxu0 0.0
    %1417 = vmatpush.msra.mxu0 0.0
    %1418 = vmatpush.msra.mxu0 0.0
    %1419 = vmatpush.msra.mxu0 0.0
    %1420 = vmatpush.msra.mxu0 0.0
    %1421 = vmatpush.msra.mxu0 0.0
    %1422 = vmatpush.msra.mxu0 0.0
    %1423 = vmatpush.msra.mxu0 0.0
    %1424 = vmatpush.msra.mxu0 0.0
    %1425 = vmatpush.msra.mxu0 0.0
    %1426 = vmatpush.msra.mxu0 0.0
    %1427 = vmatpush.msra.mxu0 0.0
    %1428 = vmatpush.msra.mxu0 %v1408
    %1429 = vmatmul.f32.gmra.mxu0 %v1411
    %v1430 = vpop.f32.mrf.mxu0
    %v1431 = vadd.f32 0.0, %v1430
    %1432 = vdwg.mxu0
    %1435 = vrot.lane.b32.xlu0 %v1301, 8
    %v1436 = vpop.permute.xlu0 %1435
    %1437 = vrot.lane.b32.xlu0 %v1327, 8
    %v1438 = vpop.permute.xlu0 %1437
    %1443 = vrot.lane.b32.xlu0 %v1353, 16
    %v1444 = vpop.permute.xlu0 %1443
    %1445 = vrot.lane.b32.xlu0 %v1379, 16
    %v1446 = vpop.permute.xlu0 %1445
    %1451 = vrot.lane.b32.xlu0 %v1405, 24
    %v1452 = vpop.permute.xlu0 %1451
    %1453 = vrot.lane.b32.xlu0 %v1431, 24
    %v1454 = vpop.permute.xlu0 %1453
    %v1457 = vsel %vm102, %v1249, %v1436
    %v1458 = vsel %vm102, %v1275, %v1438
    %v1459 = vsel %vm631, %v1457, %v1444
    %v1460 = vsel %vm631, %v1458, %v1446
    %v1461 = vsel %vm634, %v1459, %v1452
    %v1462 = vsel %vm634, %v1460, %v1454
    %s1463 = scalar_lea.vmem %s2, 32
    %v1464 = vld [vmem:[%s1463] sm:$0xff]
    %v1465 = vld [vmem:[%s1463 + $0x8] sm:$0xff]
    %v1466 = vld [vmem:[%s1463 + $0x10] sm:$0xff]
    %v1467 = vld [vmem:[%s1463 + $0x18] sm:$0xff]
    %s1468 = scalar_lea.vmem %s3, 1
    %v1469 = vld [vmem:[%s1468] sm:$0x1]
    %v1471 = vperm.slane %v1469, 0
    %v1474 = vsel %vm68, %v1461, 0
    %v1477 = vsel %vm68, %v1462, 0
    %1479 = vmatpush.msra.mxu0 0.0
    %1480 = vmatpush.msra.mxu0 0.0
    %1481 = vmatpush.msra.mxu0 0.0
    %1482 = vmatpush.msra.mxu0 0.0
    %1483 = vmatpush.msra.mxu0 0.0
    %1484 = vmatpush.msra.mxu0 0.0
    %1485 = vmatpush.msra.mxu0 0.0
    %1486 = vmatpush.msra.mxu0 0.0
    %1487 = vmatpush.msra.mxu0 0.0
    %1488 = vmatpush.msra.mxu0 0.0
    %1489 = vmatpush.msra.mxu0 0.0
    %1490 = vmatpush.msra.mxu0 0.0
    %1491 = vmatpush.msra.mxu0 %v1467
    %1492 = vmatpush.msra.mxu0 %v1466
    %1493 = vmatpush.msra.mxu0 %v1465
    %1494 = vmatpush.msra.mxu0 %v1464
    %1495 = vmatmul.f32.gmra.mxu0 %v1474
    %v1496 = vpop.f32.mrf.mxu0
    %v1497 = vadd.f32 %v1471, %v1496
    %1498 = vmatmul.f32.gmra.mxu0 %v1477
    %v1499 = vpop.f32.mrf.mxu0
    %v1500 = vadd.f32 %v1471, %v1499
    %1501 = vdwg.mxu0
    %v1502 = vadd.f32 %v1497, %v878
    %v1503 = vadd.f32 %v1500, %v879
    %s1504 = scalar_lea.vmem %s4, 1
    %v1505 = vld [vmem:[%s1504] sm:$0x1]
    %s1506 = scalar_lea.vmem %s5, 1
    %v1507 = vld [vmem:[%s1506] sm:$0x1]
    %v1508 = vsel %vm68, %v1502, 0.0
    %1509 = vadd.xlane.f32.xlu0 %v1508
    %v1510 = vpop.xlane.xlu0 %1509
    %v1511 = vsel %vm68, %v1503, 0.0
    %1512 = vadd.xlane.f32.xlu0 %v1511
    %v1513 = vpop.xlane.xlu0 %1512
    %v1514 = vmul.f32 %v1510, %v690
    %v1515 = vmul.f32 %v1513, %v690
    %v1516 = vsub.f32 %v1502, %v1514
    %v1517 = vsub.f32 %v1503, %v1515
    %v1518 = vmul.f32 %v1516, %v1516
    %v1519 = vmul.f32 %v1517, %v1517
    %v1520 = vsel %vm68, %v1518, 0.0
    %1521 = vadd.xlane.f32.xlu0 %v1520
    %v1522 = vpop.xlane.xlu0 %1521
    %v1523 = vsel %vm68, %v1519, 0.0
    %1524 = vadd.xlane.f32.xlu0 %v1523
    %v1525 = vpop.xlane.xlu0 %1524
    %v1526 = vmul.f32 %v1522, %v690
    %v1527 = vmul.f32 %v1525, %v690
    %v1528 = vadd.f32 %v1526, 1e-05
    %v1529 = vadd.f32 %v1527, 1e-05
    %v1530 = vrsqrt.pop %v1528
    %v1531 = vmul.f32 %v1530, %v1528
    %v1532 = vmul.f32 %v1531, %v1530
    %v1533 = vmul.f32 0.5, %v1532
    %v1534 = vsub.f32 1.5, %v1533
    %v1535 = vmul.f32 %v1530, %v1534
    %vm1536 = vweird.f32 %v1528
    %vm1537 = vweird.f32 %v1530
    %vm1538 = vmor %vm1536, %vm1537
    %v1539 = vsel %vm1538, %v1530, %v1535
    %v1540 = vrsqrt.pop %v1529
    %v1541 = vmul.f32 %v1540, %v1529
    %v1542 = vmul.f32 %v1541, %v1540
    %v1543 = vmul.f32 0.5, %v1542
    %v1544 = vsub.f32 1.5, %v1543
    %v1545 = vmul.f32 %v1540, %v1544
    %vm1546 = vweird.f32 %v1529
    %vm1547 = vweird.f32 %v1540
    %vm1548 = vmor %vm1546, %vm1547
    %v1549 = vsel %vm1548, %v1540, %v1545
    %v1550 = vmul.f32 %v1516, %v1539
    %v1551 = vmul.f32 %v1517, %v1549
    %v1553 = vperm.slane %v1505, 0
    %v1555 = vmul.f32 %v1550, %v1553
    %v1556 = vmul.f32 %v1551, %v1553
    %v1558 = vperm.slane %v1507, 0
    %v1560 = vadd.f32 %v1555, %v1558
    %v1561 = vadd.f32 %v1556, %v1558
    %v1562 = vpack.c.bf16 %v1561, %v1560
    %s1563 = scalar_lea.vmem %s6, 16
    %v1564 = vld [vmem:[%s1563] sm:$0xf]
    %v1565 = vld [vmem:[%s1563 + $0x4] sm:$0xf]
    %v1566 = vld [vmem:[%s1563 + $0x8] sm:$0xf]
    %v1567 = vld [vmem:[%s1563 + $0xc] sm:$0xf]
    %s1568 = scalar_lea.vmem %s7, 1
    %v1569 = vld [vmem:[%s1568] sm:$0x1]
    %v1571 = vperm.slane %v1569, 0
    %v1577 = vunpack.c.l.b16 %v1564
    %v1578 = vunpack.c.l.b16 %v1565
    %v1579 = vunpack.c.l.b16 %v1566
    %v1580 = vunpack.c.l.b16 %v1567
    %v1581 = vpack.c.b16 %v1578, %v1577
    %v1582 = vpack.c.b16 %v1580, %v1579
    %v1586 = vsel %vm68, %v1562, 0
    %1588 = vmatpush.bf16.msra.mxu0 0
    %1589 = vmatpush.bf16.msra.mxu0 0
    %1590 = vmatpush.bf16.msra.mxu0 0
    %1591 = vmatpush.bf16.msra.mxu0 0
    %1592 = vmatpush.bf16.msra.mxu0 0
    %1593 = vmatpush.bf16.msra.mxu0 0
    %1594 = vmatpush.bf16.msra.mxu0 %v1582
    %1595 = vmatpush.bf16.msra.mxu0 %v1581
    %1596 = vmatmul.bf16.gmra.mxu0 %v1586
    %v1597 = vpop.f32.mrf.mxu0
    %v1598 = vadd.f32 %v1571, %v1597
    %v1599 = vpop.f32.mrf.mxu0
    %v1600 = vadd.f32 %v1571, %v1599
    %1601 = vdwg.mxu0
    %v1602 = vmax.f32 %v1598, 0.0
    %v1603 = vmax.f32 %v1600, 0.0
    %s1604 = scalar_lea.vmem %s8, 128
    %v1605 = vld [vmem:[%s1604] sm:$0xff]
    %v1606 = vld [vmem:[%s1604 + $0x8] sm:$0xff]
    %v1607 = vld [vmem:[%s1604 + $0x10] sm:$0xff]
    %v1608 = vld [vmem:[%s1604 + $0x18] sm:$0xff]
    %v1609 = vld [vmem:[%s1604 + $0x20] sm:$0xff]
    %v1610 = vld [vmem:[%s1604 + $0x28] sm:$0xff]
    %v1611 = vld [vmem:[%s1604 + $0x30] sm:$0xff]
    %v1612 = vld [vmem:[%s1604 + $0x38] sm:$0xff]
    %v1613 = vld [vmem:[%s1604 + $0x40] sm:$0xff]
    %v1614 = vld [vmem:[%s1604 + $0x48] sm:$0xff]
    %v1615 = vld [vmem:[%s1604 + $0x50] sm:$0xff]
    %v1616 = vld [vmem:[%s1604 + $0x58] sm:$0xff]
    %v1617 = vld [vmem:[%s1604 + $0x60] sm:$0xff]
    %v1618 = vld [vmem:[%s1604 + $0x68] sm:$0xff]
    %v1619 = vld [vmem:[%s1604 + $0x70] sm:$0xff]
    %v1620 = vld [vmem:[%s1604 + $0x78] sm:$0xff]
    %s1621 = scalar_lea.vmem %s9, 1
    %v1622 = vld [vmem:[%s1621] sm:$0x1]
    %v1624 = vperm.slane %v1622, 0
    %1626 = vmatpush.msra.mxu0 %v1620
    %1627 = vmatpush.msra.mxu0 %v1619
    %1628 = vmatpush.msra.mxu0 %v1618
    %1629 = vmatpush.msra.mxu0 %v1617
    %1630 = vmatpush.msra.mxu0 %v1616
    %1631 = vmatpush.msra.mxu0 %v1615
    %1632 = vmatpush.msra.mxu0 %v1614
    %1633 = vmatpush.msra.mxu0 %v1613
    %1634 = vmatpush.msra.mxu0 %v1612
    %1635 = vmatpush.msra.mxu0 %v1611
    %1636 = vmatpush.msra.mxu0 %v1610
    %1637 = vmatpush.msra.mxu0 %v1609
    %1638 = vmatpush.msra.mxu0 %v1608
    %1639 = vmatpush.msra.mxu0 %v1607
    %1640 = vmatpush.msra.mxu0 %v1606
    %1641 = vmatpush.msra.mxu0 %v1605
    %1642 = vmatmul.f32.gmra.mxu0 %v1602
    %v1643 = vpop.f32.mrf.mxu0
    %v1644 = vadd.f32 %v1624, %v1643
    %1645 = vmatmul.f32.gmra.mxu0 %v1603
    %v1646 = vpop.f32.mrf.mxu0
    %v1647 = vadd.f32 %v1624, %v1646
    %1648 = vdwg.mxu0
    %v1649 = vadd.f32 %v1644, %v1560
    %v1650 = vadd.f32 %v1647, %v1561
    %s1651 = scalar_lea.vmem %s10, 1
    %v1652 = vld [vmem:[%s1651] sm:$0x1]
    %s1653 = scalar_lea.vmem %s11, 1
    %v1654 = vld [vmem:[%s1653] sm:$0x1]
    %v1655 = vsel %vm68, %v1649, 0.0
    %1656 = vadd.xlane.f32.xlu0 %v1655
    %v1657 = vpop.xlane.xlu0 %1656
    %v1658 = vsel %vm68, %v1650, 0.0
    %1659 = vadd.xlane.f32.xlu0 %v1658
    %v1660 = vpop.xlane.xlu0 %1659
    %v1661 = vmul.f32 %v1657, %v690
    %v1662 = vmul.f32 %v1660, %v690
    %v1663 = vsub.f32 %v1649, %v1661
    %v1664 = vsub.f32 %v1650, %v1662
    %v1665 = vmul.f32 %v1663, %v1663
    %v1666 = vmul.f32 %v1664, %v1664
    %v1667 = vsel %vm68, %v1665, 0.0
    %1668 = vadd.xlane.f32.xlu0 %v1667
    %v1669 = vpop.xlane.xlu0 %1668
    %v1670 = vsel %vm68, %v1666, 0.0
    %1671 = vadd.xlane.f32.xlu0 %v1670
    %v1672 = vpop.xlane.xlu0 %1671
    %v1673 = vmul.f32 %v1669, %v690
    %v1674 = vmul.f32 %v1672, %v690
    %v1675 = vadd.f32 %v1673, 1e-05
    %v1676 = vadd.f32 %v1674, 1e-05
    %v1677 = vrsqrt.pop %v1675
    %v1678 = vmul.f32 %v1677, %v1675
    %v1679 = vmul.f32 %v1678, %v1677
    %v1680 = vmul.f32 0.5, %v1679
    %v1681 = vsub.f32 1.5, %v1680
    %v1682 = vmul.f32 %v1677, %v1681
    %vm1683 = vweird.f32 %v1675
    %vm1684 = vweird.f32 %v1677
    %vm1685 = vmor %vm1683, %vm1684
    %v1686 = vsel %vm1685, %v1677, %v1682
    %v1687 = vrsqrt.pop %v1676
    %v1688 = vmul.f32 %v1687, %v1676
    %v1689 = vmul.f32 %v1688, %v1687
    %v1690 = vmul.f32 0.5, %v1689
    %v1691 = vsub.f32 1.5, %v1690
    %v1692 = vmul.f32 %v1687, %v1691
    %vm1693 = vweird.f32 %v1676
    %vm1694 = vweird.f32 %v1687
    %vm1695 = vmor %vm1693, %vm1694
    %v1696 = vsel %vm1695, %v1687, %v1692
    %v1697 = vmul.f32 %v1663, %v1686
    %v1698 = vmul.f32 %v1664, %v1696
    %v1700 = vperm.slane %v1652, 0
    %v1702 = vmul.f32 %v1697, %v1700
    %v1703 = vmul.f32 %v1698, %v1700
    %v1705 = vperm.slane %v1654, 0
    %v1707 = vadd.f32 %v1702, %v1705
    %v1708 = vadd.f32 %v1703, %v1705
    %v1709 = vsel %vm68, %v1707, -inf
    %v1710 = vrot.slane %v1709, 4
    %v1711 = vmax.f32 %v1709, %v1710
    %v1712 = vrot.slane %v1711, 2
    %v1713 = vmax.f32 %v1711, %v1712
    %v1714 = vrot.slane %v1713, 1
    %v1715 = vmax.f32 %v1713, %v1714
    %v1716 = vsel %vm68, %v1708, -inf
    %v1717 = vrot.slane %v1716, 4
    %v1718 = vmax.f32 %v1716, %v1717
    %v1719 = vrot.slane %v1718, 2
    %v1720 = vmax.f32 %v1718, %v1719
    %v1721 = vrot.slane %v1720, 1
    %v1722 = vmax.f32 %v1720, %v1721
    %v1723 = vpack.c.bf16 %v1715, %v1715
    %v1724 = vpack.c.bf16 %v1722, %v1722
    %v1725 = vld [vmem:[%s12] sm:$0xf]
    %v1726 = vld [vmem:[%s12 + $0x4] sm:$0xf]
    %v1727 = vld [vmem:[%s12 + $0x8] sm:$0xf]
    %v1728 = vld [vmem:[%s12 + $0xc] sm:$0xf]
    %v1729 = vld [vmem:[%s13] sm:$0x1]
    %v1731 = vperm.slane %v1729, 0
    %v1735 = vunpack.c.l.b16 %v1723
    %v1736 = vunpack.c.l.b16 %v1724
    %vm1737 = vcmask 1041409
    %v1738 = vsel %vm1737, %v1736, %v1735
    %v1739 = vpack.c.b16 %v1738, %v1738
    %v1744 = vunpack.c.l.b16 %v1725
    %v1745 = vunpack.c.l.b16 %v1726
    %v1746 = vunpack.c.l.b16 %v1727
    %v1747 = vunpack.c.l.b16 %v1728
    %v1748 = vpack.c.b16 %v1745, %v1744
    %v1749 = vpack.c.b16 %v1747, %v1746
    %v1753 = vsel %vm68, %v1739, 0
    %1755 = vmatpush.bf16.msra.mxu0 0
    %1756 = vmatpush.bf16.msra.mxu0 0
    %1757 = vmatpush.bf16.msra.mxu0 0
    %1758 = vmatpush.bf16.msra.mxu0 0
    %1759 = vmatpush.bf16.msra.mxu0 0
    %1760 = vmatpush.bf16.msra.mxu0 0
    %1761 = vmatpush.bf16.msra.mxu0 %v1749
    %1762 = vmatpush.bf16.msra.mxu0 %v1748
    %1763 = vmatmul.bf16.gmra.mxu0 %v1753
    %v1764 = vpop.f32.mrf.mxu0
    %v1765 = vadd.f32 %v1731, %v1764
    %v1766 = vpop.f32.mrf.mxu0
    %1767 = vdwg.mxu0
    %vm1768 = vcmask 1041408
    %v1769 = vsel %vm1768, %v1765, -inf
    %1770 = vmax.xlane.f32.xlu0 %v1769
    %v1771 = vpop.xlane.xlu0 %1770
    %v1772 = vsub.f32 %v1765, %v1771
    %v1773 = vmul.f32 %v1772, 1.442695
    %v1774 = vpow.pop %v1773
    %v1775 = vsel %vm1768, %v1774, 0.0
    %1776 = vadd.xlane.f32.xlu0 %v1775
    %v1777 = vpop.xlane.xlu0 %1776
    %v1778 = vlog2.pop %v1777
    %v1779 = vmul.f32 %v1778, 0.6931472
    %v1780 = vadd.f32 %v1771, %v1779
    %v1781 = vsub.f32 %v1765, %v1780
    %1782 = vst [vmem:[#allocation2] sm:$0x3] %v1781
    // Predicated region
    $region58: #{ctransformer_forward.1} parent=1 // pred_check
      _
    $region59: #{ctransformer_forward.1} parent=1 // pred_check_branch
      %1784 = sbr.rel (0) target = $region61
    $region60: #{ctransformer_forward.1} parent=1 // pred_region
      %1786 = vsyncadd [#allocation3], 0
      %s1788 = sshll.u32 [#allocation2], 4
      %s1789 = int_to_ptr.vmem [resolvable:$true] %s1788
      %s1790 = sshll.u32 %s14, 4
      %s1791 = int_to_ptr.hbm [resolvable:$true] %s1790
      %1793 = dma.vmem_to_hbm [thread:$0]  %s1789, 32, %s1791, [#allocation3]
    $region61: #{ctransformer_forward.1} parent=1 // pred_fallthru
      _
    // Predicated region
    $region62: #{ctransformer_forward.1} parent=1 // pred_check
      _
    $region63: #{ctransformer_forward.1} parent=1 // pred_check_branch
      %1795 = sbr.rel (0) target = $region65
    $region64: #{ctransformer_forward.1} parent=1 // pred_region
      %1797 = dma.done [#allocation3], 32
    $region65: #{ctransformer_forward.1} parent=1 // pred_fallthru
      _
    %1798 = vsyncpa [#allocation3], 1

</llo_original>
